<compile_context>
chip_gen: v5e
topology: v5e:2x2
jax: 0.10.0
libtpu: 0.0.40
codegen_flags: <defaults>
</compile_context>

<pallas_src>
import functools
import math

import jax
import jax.numpy as jnp
from jax.experimental import pallas as pl
from jax.experimental.pallas import tpu as pltpu


# Operand dtype for MXU matmuls (accumulation is always float32).
_MXU_DTYPE = jnp.bfloat16


# ---------------------------------------------------------------------------
# Fused kernel: one batch element per grid step
# ---------------------------------------------------------------------------

def _fused_hybrid_attention_kernel(
    q_ref, k_ref, v_ref,
    wq_ref, wk_ref, wv_ref, wo_ref,
    bq_ref, bk_ref, bv_ref, bo_ref,
    mask_ref,
    o_ref,
    qh_s, kh_s, vh_s, ctx_s, merge_s,
    *, num_heads, levels, factor, window,
):
    f32 = jnp.float32
    cdt = _MXU_DTYPE
    L, E = q_ref.shape
    H = num_heads
    d = E // H

    # ---- weights (already in MXU dtype; wq/bq pre-scaled by 1/sqrt(d)) ------
    wq = wq_ref[...]
    wk = wk_ref[...]
    wv = wv_ref[...]
    wo = wo_ref[...]

    # ---- Q/K/V in-projections: ONE matmul each, reused everywhere -----------
    qp = jnp.dot(q_ref[...].astype(cdt), wq, preferred_element_type=f32) + bq_ref[...]
    kp = jnp.dot(k_ref[...].astype(cdt), wk, preferred_element_type=f32) + bk_ref[...]
    vp = jnp.dot(v_ref[...].astype(cdt), wv, preferred_element_type=f32) + bv_ref[...]

    # ---- split heads ONCE into head-batched (H, L, d) VMEM scratch -----------
    for h in range(H):
        sl = slice(h * d, (h + 1) * d)
        qh_s[h, :, :] = qp[:, sl]
        kh_s[h, :, :] = kp[:, sl]
        vh_s[h, :, :] = vp[:, sl]

    qh = qh_s[...].astype(cdt)                      # (H, L, d), cast once

    def attend(k_lvl, v_lvl, q_heads):
        """Head-batched softmax attention; returns (H, lq, d) f32 context."""
        kb = k_lvl.astype(cdt)
        vb = v_lvl.astype(cdt)
        s = jnp.einsum('hqd,hkd->hqk', q_heads, kb, preferred_element_type=f32)
        m = jnp.max(s, axis=-1, keepdims=True)
        p = jnp.exp(s - m)
        denom = jnp.sum(p, axis=-1, keepdims=True)
        ctx = jnp.einsum('hqk,hkd->hqd', p.astype(cdt), vb, preferred_element_type=f32)
        # deferred softmax normalisation: (lq, d) multiply instead of (lq, lk)
        return ctx * pl.reciprocal(denom, approx=True)

    # ---- hierarchical branch: level 0 + mean-pooled levels -------------------
    # Pooling commutes with the affine K/V projection (pool rows sum to 1), and
    # level-l pooling == mean of f**l consecutive positions -> f32 strided reads
    # from the head-split scratch, no pool matrices, no extra matmuls.
    hier = attend(kh_s[...], vh_s[...], qh)
    stride = 1
    for _ in range(1, levels):
        stride *= factor
        l_lvl = L // stride
        k_lvl = kh_s[:, pl.ds(0, l_lvl, stride=stride), :]
        v_lvl = vh_s[:, pl.ds(0, l_lvl, stride=stride), :]
        for j in range(1, stride):
            k_lvl = k_lvl + kh_s[:, pl.ds(j, l_lvl, stride=stride), :]
            v_lvl = v_lvl + vh_s[:, pl.ds(j, l_lvl, stride=stride), :]
        inv = 1.0 / stride
        hier = hier + attend(k_lvl * inv, v_lvl * inv, qh)

    ctx_s[...] = hier * (1.0 / levels)

    # ---- sliding-window branch: heads batched, partials stay in VMEM ---------
    n_full = L // window
    rem = L - n_full * window
    for w in range(n_full):
        sl = slice(w * window, (w + 1) * window)
        ctx_w = attend(kh_s[:, sl, :], vh_s[:, sl, :], qh[:, sl, :])
        ctx_s[:, sl, :] = ctx_s[:, sl, :] + ctx_w
    if rem > 0:                                       # tail window (not hit in demo)
        sl = slice(n_full * window, L)
        ctx_w = attend(kh_s[:, sl, :], vh_s[:, sl, :], qh[:, sl, :])
        ctx_s[:, sl, :] = ctx_s[:, sl, :] + ctx_w

    # ---- merge heads back onto the lane axis, ONE K=E out-projection ---------
    combined = ctx_s[...]                             # (H, L, d) f32
    for h in range(H):
        merge_s[:, h * d:(h + 1) * d] = combined[h]
    out = jnp.dot(merge_s[...].astype(cdt), wo, preferred_element_type=f32)
    # hierarchical branch carries one out-proj bias, sliding branch one -> 2*bo
    out = out + 2.0 * bo_ref[...]
    out = out * jax.nn.sigmoid(mask_ref[...])
    o_ref[...] = out.astype(o_ref.dtype)              # single dense (L, E) store
    # TODO(synk): global_indices=[] and attention_mask=None in the reference
    # usage, so the global-attention branch and mask application are no-ops.


# ---------------------------------------------------------------------------
# Cost / VMEM sizing helpers
# ---------------------------------------------------------------------------

def _level_lengths(L, levels, factor):
    lengths = [L]
    cur = L
    for _ in range(levels - 1):
        cur //= factor
        lengths.append(cur)
    return lengths


def _cost_estimate(B, L, E, H, levels, factor, window, in_dtype, w_dtype):
    lengths = _level_lengths(L, levels, factor)
    n_full, rem = divmod(L, window)
    attn = sum(4 * L * lk * E for lk in lengths)
    attn += n_full * 4 * window * window * E + 4 * rem * rem * E
    proj = 2 * L * E * E * 4                     # 3 in-projections + 1 out-projection
    flops = B * (proj + attn)
    exps = B * H * (L * sum(lengths) + n_full * window * window + rem * rem)
    trans = exps + B * L                         # + sigmoid soft mask
    in_b = jnp.dtype(in_dtype).itemsize
    w_b = jnp.dtype(w_dtype).itemsize
    bytes_accessed = (B * L * E * 4 * in_b      # q, k, v, out
                      + 4 * E * E * w_b + 4 * E * 4 + L * 4)
    return pl.CostEstimate(flops=int(flops), transcendentals=int(trans),
                           bytes_accessed=int(bytes_accessed))


def _vmem_limit_bytes(L, E, H, d, in_itemsize, w_itemsize):
    rup = lambda x, m: -(-x // m) * m
    slab = rup(L, 8) * rup(E, 128)
    io = 2 * slab * 4 * in_itemsize                                   # q,k,v,out x2 buffers
    weights = 2 * (4 * rup(E, 8) * rup(E, 128) * w_itemsize
                   + 4 * 8 * rup(E, 128) * 4 + rup(L, 8) * 128 * 4)
    scratch = 4 * H * rup(L, 8) * rup(d, 128) * 4 + slab * 4
    scores = 3 * H * rup(L, 8) * rup(L, 128) * 4                      # s / p / slack
    total = io + weights + scratch + scores
    return int(min(max(2 * total, 16 * 1024 * 1024), 48 * 1024 * 1024))


# ---------------------------------------------------------------------------
# Wrapper
# ---------------------------------------------------------------------------

def hybrid_masked_attention(q, k, v, params, *, num_heads, levels, factor, window):
    B, L, E = q.shape
    assert E % num_heads == 0, "embed_dim must be divisible by num_heads"
    head_dim = E // num_heads
    max_seq_len = params["soft_mask"].shape[0]
    if L > max_seq_len:
        raise ValueError(f"sequence length {L} exceeds soft_mask length {max_seq_len}")
    l_chk = L
    for _ in range(levels - 1):
        l_chk //= factor
        assert l_chk >= 1, "sequence too short for the requested hierarchy depth"

    f32 = jnp.float32
    wdt = _MXU_DTYPE
    scale = 1.0 / math.sqrt(head_dim)

    # 1/sqrt(head_dim) folded into the Q projection; weights pre-cast to bf16
    # in the wrapper (halves weight DMA / double-buffered VMEM footprint).
    wq = (params["wq"].astype(f32) * scale).astype(wdt)
    wk = params["wk"].astype(wdt)
    wv = params["wv"].astype(wdt)
    wo = params["wo"].astype(wdt)
    bq = (params["bq"].astype(f32) * scale).reshape(1, E)
    bk = params["bk"].astype(f32).reshape(1, E)
    bv = params["bv"].astype(f32).reshape(1, E)
    bo = params["bo"].astype(f32).reshape(1, E)
    soft_mask = params["soft_mask"][:L].astype(f32).reshape(L, 1)

    kernel = functools.partial(
        _fused_hybrid_attention_kernel,
        num_heads=num_heads, levels=levels, factor=factor, window=window)

    bhe_spec = pl.BlockSpec((None, L, E), lambda b: (b, 0, 0))   # per-batch slab
    const = lambda shape: pl.BlockSpec(shape, lambda b: (0, 0))  # grid-invariant

    in_specs = (
        [bhe_spec, bhe_spec, bhe_spec]            # q, k, v
        + [const((E, E))] * 4                     # wq, wk, wv, wo
        + [const((1, E))] * 4                     # bq, bk, bv, bo
        + [const((L, 1))]                         # soft_mask (positions on sublanes)
    )

    scratch_shapes = [
        pltpu.VMEM((num_heads, L, head_dim), f32),   # qh (head-split)
        pltpu.VMEM((num_heads, L, head_dim), f32),   # kh
        pltpu.VMEM((num_heads, L, head_dim), f32),   # vh
        pltpu.VMEM((num_heads, L, head_dim), f32),   # combined context accumulator
        pltpu.VMEM((L, E), f32),                     # merged-heads buffer
    ]

    return pl.pallas_call(
        kernel,
        out_shape=jax.ShapeDtypeStruct((B, L, E), q.dtype),
        grid=(B,),
        in_specs=in_specs,
        out_specs=bhe_spec,
        scratch_shapes=scratch_shapes,
        compiler_params=pltpu.CompilerParams(
            dimension_semantics=("parallel",),
            vmem_limit_bytes=_vmem_limit_bytes(
                L, E, num_heads, head_dim, q.dtype.itemsize,
                jnp.dtype(wdt).itemsize),
        ),
        cost_estimate=_cost_estimate(
            B, L, E, num_heads, levels, factor, window, q.dtype, wdt),
    )(q, k, v, wq, wk, wv, wo, bq, bk, bv, bo, soft_mask)


# ---------------------------------------------------------------------------
# main
# ---------------------------------------------------------------------------

if __name__ == "__main__":
    B, L, E, H = 2, 8, 32, 4
    LEVELS, FACTOR, WINDOW, MAX_SEQ_LEN = 3, 2, 4, 16

    root = jax.random.PRNGKey(0)
    ks = jax.random.split(root, 8)

    q = jax.random.normal(ks[0], (B, L, E), jnp.float32)
    k = jax.random.normal(ks[1], (B, L, E), jnp.float32)
    v = jax.random.normal(ks[2], (B, L, E), jnp.float32)

    params = {
        "wq": 0.1 * jax.random.normal(ks[3], (E, E), jnp.float32),
        "wk": 0.1 * jax.random.normal(ks[4], (E, E), jnp.float32),
        "wv": 0.1 * jax.random.normal(ks[5], (E, E), jnp.float32),
        "wo": 0.1 * jax.random.normal(ks[6], (E, E), jnp.float32),
        "bq": jnp.zeros((1, E), jnp.float32),
        "bk": jnp.zeros((1, E), jnp.float32),
        "bv": jnp.zeros((1, E), jnp.float32),
        "bo": jnp.zeros((1, E), jnp.float32),
        # nn.Parameter(torch.ones(max_seq_len))
        "soft_mask": jnp.ones((MAX_SEQ_LEN,), jnp.float32),
    }

    out = hybrid_masked_attention(
        q, k, v, params, num_heads=H, levels=LEVELS, factor=FACTOR, window=WINDOW
    )
    jax.block_until_ready(out)
    assert out.shape == (B, L, E)
    assert bool(jnp.all(jnp.isfinite(out)))
    print("KERNEL_OK")
</pallas_src>

<mosaic_0001>
module attributes {stable_mosaic.version = 11 : i64} {
  func.func @_fused_hybrid_attention_kernel(%arg0: i32, %arg1: memref<1x8x32xf32, #tpu.memory_space<vmem>>, %arg2: memref<1x8x32xf32, #tpu.memory_space<vmem>>, %arg3: memref<1x8x32xf32, #tpu.memory_space<vmem>>, %arg4: memref<32x32xbf16, #tpu.memory_space<vmem>>, %arg5: memref<32x32xbf16, #tpu.memory_space<vmem>>, %arg6: memref<32x32xbf16, #tpu.memory_space<vmem>>, %arg7: memref<32x32xbf16, #tpu.memory_space<vmem>>, %arg8: memref<1x32xf32, #tpu.memory_space<vmem>>, %arg9: memref<1x32xf32, #tpu.memory_space<vmem>>, %arg10: memref<1x32xf32, #tpu.memory_space<vmem>>, %arg11: memref<1x32xf32, #tpu.memory_space<vmem>>, %arg12: memref<8x1xf32, #tpu.memory_space<vmem>>, %arg13: memref<1x8x32xf32, #tpu.memory_space<vmem>>, %arg14: memref<4x8x8xf32, #tpu.memory_space<vmem>>, %arg15: memref<4x8x8xf32, #tpu.memory_space<vmem>>, %arg16: memref<4x8x8xf32, #tpu.memory_space<vmem>>, %arg17: memref<4x8x8xf32, #tpu.memory_space<vmem>>, %arg18: memref<8x32xf32, #tpu.memory_space<vmem>>) attributes {dimension_semantics = [#tpu.dimension_semantics<parallel>], iteration_bounds = array<i64: 2>, scalar_prefetch = 0 : i64, scratch_operands = 5 : i64, tpu.core_type = #tpu.core_type<tc>, window_params = [{transform_indices = @transform_0, window_bounds = array<i64: 1, 8, 32>}, {transform_indices = @transform_1, window_bounds = array<i64: 1, 8, 32>}, {transform_indices = @transform_2, window_bounds = array<i64: 1, 8, 32>}, {pipeline_mode = #tpu.pipeline_mode<synchronous>, transform_indices = @transform_3, window_bounds = array<i64: 32, 32>}, {pipeline_mode = #tpu.pipeline_mode<synchronous>, transform_indices = @transform_4, window_bounds = array<i64: 32, 32>}, {pipeline_mode = #tpu.pipeline_mode<synchronous>, transform_indices = @transform_5, window_bounds = array<i64: 32, 32>}, {pipeline_mode = #tpu.pipeline_mode<synchronous>, transform_indices = @transform_6, window_bounds = array<i64: 32, 32>}, {pipeline_mode = #tpu.pipeline_mode<synchronous>, transform_indices = @transform_7, window_bounds = array<i64: 1, 32>}, {pipeline_mode = #tpu.pipeline_mode<synchronous>, transform_indices = @transform_8, window_bounds = array<i64: 1, 32>}, {pipeline_mode = #tpu.pipeline_mode<synchronous>, transform_indices = @transform_9, window_bounds = array<i64: 1, 32>}, {pipeline_mode = #tpu.pipeline_mode<synchronous>, transform_indices = @transform_10, window_bounds = array<i64: 1, 32>}, {pipeline_mode = #tpu.pipeline_mode<synchronous>, transform_indices = @transform_11, window_bounds = array<i64: 8, 1>}, {transform_indices = @transform_12, window_bounds = array<i64: 1, 8, 32>}]} {
    %c0 = arith.constant 0 : index
    %c0_0 = arith.constant 0 : index
    %0 = vector.load %arg4[%c0, %c0_0] : memref<32x32xbf16, #tpu.memory_space<vmem>>, vector<32x32xbf16>
    %c0_1 = arith.constant 0 : index
    %c0_2 = arith.constant 0 : index
    %1 = vector.load %arg5[%c0_1, %c0_2] : memref<32x32xbf16, #tpu.memory_space<vmem>>, vector<32x32xbf16>
    %c0_3 = arith.constant 0 : index
    %c0_4 = arith.constant 0 : index
    %2 = vector.load %arg6[%c0_3, %c0_4] : memref<32x32xbf16, #tpu.memory_space<vmem>>, vector<32x32xbf16>
    %c0_5 = arith.constant 0 : index
    %c0_6 = arith.constant 0 : index
    %3 = vector.load %arg7[%c0_5, %c0_6] : memref<32x32xbf16, #tpu.memory_space<vmem>>, vector<32x32xbf16>
    %c0_7 = arith.constant 0 : index
    %c0_8 = arith.constant 0 : index
    %c0_9 = arith.constant 0 : index
    %4 = vector.load %arg1[%c0_7, %c0_8, %c0_9] : memref<1x8x32xf32, #tpu.memory_space<vmem>>, vector<1x8x32xf32>
    %5 = vector.shape_cast %4 : vector<1x8x32xf32> to vector<8x32xf32>
    %6 = arith.truncf %5 : vector<8x32xf32> to vector<8x32xbf16>
    %cst = arith.constant dense<0.000000e+00> : vector<8x32xf32>
    %7 = tpu.matmul %6, %0, %cst {dimension_numbers = #tpu.dot_dimension_numbers<[1], [0], [0], [1], [0, 0, 1, 1], [], []>} : vector<8x32xbf16>, vector<32x32xbf16>, vector<8x32xf32> -> vector<8x32xf32>
    %c0_10 = arith.constant 0 : index
    %c0_11 = arith.constant 0 : index
    %8 = vector.load %arg8[%c0_10, %c0_11] : memref<1x32xf32, #tpu.memory_space<vmem>>, vector<1x32xf32>
    %9 = vector.broadcast %8 : vector<1x32xf32> to vector<8x32xf32>
    %10 = arith.addf %7, %9 : vector<8x32xf32>
    %c0_12 = arith.constant 0 : index
    %c0_13 = arith.constant 0 : index
    %c0_14 = arith.constant 0 : index
    %11 = vector.load %arg2[%c0_12, %c0_13, %c0_14] : memref<1x8x32xf32, #tpu.memory_space<vmem>>, vector<1x8x32xf32>
    %12 = vector.shape_cast %11 : vector<1x8x32xf32> to vector<8x32xf32>
    %13 = arith.truncf %12 : vector<8x32xf32> to vector<8x32xbf16>
    %cst_15 = arith.constant dense<0.000000e+00> : vector<8x32xf32>
    %14 = tpu.matmul %13, %1, %cst_15 {dimension_numbers = #tpu.dot_dimension_numbers<[1], [0], [0], [1], [0, 0, 1, 1], [], []>} : vector<8x32xbf16>, vector<32x32xbf16>, vector<8x32xf32> -> vector<8x32xf32>
    %c0_16 = arith.constant 0 : index
    %c0_17 = arith.constant 0 : index
    %15 = vector.load %arg9[%c0_16, %c0_17] : memref<1x32xf32, #tpu.memory_space<vmem>>, vector<1x32xf32>
    %16 = vector.broadcast %15 : vector<1x32xf32> to vector<8x32xf32>
    %17 = arith.addf %14, %16 : vector<8x32xf32>
    %c0_18 = arith.constant 0 : index
    %c0_19 = arith.constant 0 : index
    %c0_20 = arith.constant 0 : index
    %18 = vector.load %arg3[%c0_18, %c0_19, %c0_20] : memref<1x8x32xf32, #tpu.memory_space<vmem>>, vector<1x8x32xf32>
    %19 = vector.shape_cast %18 : vector<1x8x32xf32> to vector<8x32xf32>
    %20 = arith.truncf %19 : vector<8x32xf32> to vector<8x32xbf16>
    %cst_21 = arith.constant dense<0.000000e+00> : vector<8x32xf32>
    %21 = tpu.matmul %20, %2, %cst_21 {dimension_numbers = #tpu.dot_dimension_numbers<[1], [0], [0], [1], [0, 0, 1, 1], [], []>} : vector<8x32xbf16>, vector<32x32xbf16>, vector<8x32xf32> -> vector<8x32xf32>
    %c0_22 = arith.constant 0 : index
    %c0_23 = arith.constant 0 : index
    %22 = vector.load %arg10[%c0_22, %c0_23] : memref<1x32xf32, #tpu.memory_space<vmem>>, vector<1x32xf32>
    %23 = vector.broadcast %22 : vector<1x32xf32> to vector<8x32xf32>
    %24 = arith.addf %21, %23 : vector<8x32xf32>
    %25 = vector.extract_strided_slice %10 {offsets = [0, 0], sizes = [8, 8], strides = [1, 1]} : vector<8x32xf32> to vector<8x8xf32>
    %c0_24 = arith.constant 0 : index
    %c0_25 = arith.constant 0 : index
    %c0_26 = arith.constant 0 : index
    %26 = vector.load %arg14[%c0_24, %c0_25, %c0_26] : memref<4x8x8xf32, #tpu.memory_space<vmem>>, vector<1x8x8xf32>
    %27 = vector.shape_cast %26 : vector<1x8x8xf32> to vector<8x8xf32>
    %28 = vector.shape_cast %25 : vector<8x8xf32> to vector<1x8x8xf32>
    tpu.vector_store %arg14[%c0_24, %c0_25, %c0_26], %28 {strides = array<i32>} : memref<4x8x8xf32, #tpu.memory_space<vmem>>, vector<1x8x8xf32>,
    %29 = vector.extract_strided_slice %17 {offsets = [0, 0], sizes = [8, 8], strides = [1, 1]} : vector<8x32xf32> to vector<8x8xf32>
    %c0_27 = arith.constant 0 : index
    %c0_28 = arith.constant 0 : index
    %c0_29 = arith.constant 0 : index
    %30 = vector.load %arg15[%c0_27, %c0_28, %c0_29] : memref<4x8x8xf32, #tpu.memory_space<vmem>>, vector<1x8x8xf32>
    %31 = vector.shape_cast %30 : vector<1x8x8xf32> to vector<8x8xf32>
    %32 = vector.shape_cast %29 : vector<8x8xf32> to vector<1x8x8xf32>
    tpu.vector_store %arg15[%c0_27, %c0_28, %c0_29], %32 {strides = array<i32>} : memref<4x8x8xf32, #tpu.memory_space<vmem>>, vector<1x8x8xf32>,
    %33 = vector.extract_strided_slice %24 {offsets = [0, 0], sizes = [8, 8], strides = [1, 1]} : vector<8x32xf32> to vector<8x8xf32>
    %c0_30 = arith.constant 0 : index
    %c0_31 = arith.constant 0 : index
    %c0_32 = arith.constant 0 : index
    %34 = vector.load %arg16[%c0_30, %c0_31, %c0_32] : memref<4x8x8xf32, #tpu.memory_space<vmem>>, vector<1x8x8xf32>
    %35 = vector.shape_cast %34 : vector<1x8x8xf32> to vector<8x8xf32>
    %36 = vector.shape_cast %33 : vector<8x8xf32> to vector<1x8x8xf32>
    tpu.vector_store %arg16[%c0_30, %c0_31, %c0_32], %36 {strides = array<i32>} : memref<4x8x8xf32, #tpu.memory_space<vmem>>, vector<1x8x8xf32>,
    %37 = vector.extract_strided_slice %10 {offsets = [0, 8], sizes = [8, 8], strides = [1, 1]} : vector<8x32xf32> to vector<8x8xf32>
    %c1 = arith.constant 1 : index
    %c0_33 = arith.constant 0 : index
    %c0_34 = arith.constant 0 : index
    %38 = vector.load %arg14[%c1, %c0_33, %c0_34] : memref<4x8x8xf32, #tpu.memory_space<vmem>>, vector<1x8x8xf32>
    %39 = vector.shape_cast %38 : vector<1x8x8xf32> to vector<8x8xf32>
    %40 = vector.shape_cast %37 : vector<8x8xf32> to vector<1x8x8xf32>
    tpu.vector_store %arg14[%c1, %c0_33, %c0_34], %40 {strides = array<i32>} : memref<4x8x8xf32, #tpu.memory_space<vmem>>, vector<1x8x8xf32>,
    %41 = vector.extract_strided_slice %17 {offsets = [0, 8], sizes = [8, 8], strides = [1, 1]} : vector<8x32xf32> to vector<8x8xf32>
    %c1_35 = arith.constant 1 : index
    %c0_36 = arith.constant 0 : index
    %c0_37 = arith.constant 0 : index
    %42 = vector.load %arg15[%c1_35, %c0_36, %c0_37] : memref<4x8x8xf32, #tpu.memory_space<vmem>>, vector<1x8x8xf32>
    %43 = vector.shape_cast %42 : vector<1x8x8xf32> to vector<8x8xf32>
    %44 = vector.shape_cast %41 : vector<8x8xf32> to vector<1x8x8xf32>
    tpu.vector_store %arg15[%c1_35, %c0_36, %c0_37], %44 {strides = array<i32>} : memref<4x8x8xf32, #tpu.memory_space<vmem>>, vector<1x8x8xf32>,
    %45 = vector.extract_strided_slice %24 {offsets = [0, 8], sizes = [8, 8], strides = [1, 1]} : vector<8x32xf32> to vector<8x8xf32>
    %c1_38 = arith.constant 1 : index
    %c0_39 = arith.constant 0 : index
    %c0_40 = arith.constant 0 : index
    %46 = vector.load %arg16[%c1_38, %c0_39, %c0_40] : memref<4x8x8xf32, #tpu.memory_space<vmem>>, vector<1x8x8xf32>
    %47 = vector.shape_cast %46 : vector<1x8x8xf32> to vector<8x8xf32>
    %48 = vector.shape_cast %45 : vector<8x8xf32> to vector<1x8x8xf32>
    tpu.vector_store %arg16[%c1_38, %c0_39, %c0_40], %48 {strides = array<i32>} : memref<4x8x8xf32, #tpu.memory_space<vmem>>, vector<1x8x8xf32>,
    %49 = vector.extract_strided_slice %10 {offsets = [0, 16], sizes = [8, 8], strides = [1, 1]} : vector<8x32xf32> to vector<8x8xf32>
    %c2 = arith.constant 2 : index
    %c0_41 = arith.constant 0 : index
    %c0_42 = arith.constant 0 : index
    %50 = vector.load %arg14[%c2, %c0_41, %c0_42] : memref<4x8x8xf32, #tpu.memory_space<vmem>>, vector<1x8x8xf32>
    %51 = vector.shape_cast %50 : vector<1x8x8xf32> to vector<8x8xf32>
    %52 = vector.shape_cast %49 : vector<8x8xf32> to vector<1x8x8xf32>
    tpu.vector_store %arg14[%c2, %c0_41, %c0_42], %52 {strides = array<i32>} : memref<4x8x8xf32, #tpu.memory_space<vmem>>, vector<1x8x8xf32>,
    %53 = vector.extract_strided_slice %17 {offsets = [0, 16], sizes = [8, 8], strides = [1, 1]} : vector<8x32xf32> to vector<8x8xf32>
    %c2_43 = arith.constant 2 : index
    %c0_44 = arith.constant 0 : index
    %c0_45 = arith.constant 0 : index
    %54 = vector.load %arg15[%c2_43, %c0_44, %c0_45] : memref<4x8x8xf32, #tpu.memory_space<vmem>>, vector<1x8x8xf32>
    %55 = vector.shape_cast %54 : vector<1x8x8xf32> to vector<8x8xf32>
    %56 = vector.shape_cast %53 : vector<8x8xf32> to vector<1x8x8xf32>
    tpu.vector_store %arg15[%c2_43, %c0_44, %c0_45], %56 {strides = array<i32>} : memref<4x8x8xf32, #tpu.memory_space<vmem>>, vector<1x8x8xf32>,
    %57 = vector.extract_strided_slice %24 {offsets = [0, 16], sizes = [8, 8], strides = [1, 1]} : vector<8x32xf32> to vector<8x8xf32>
    %c2_46 = arith.constant 2 : index
    %c0_47 = arith.constant 0 : index
    %c0_48 = arith.constant 0 : index
    %58 = vector.load %arg16[%c2_46, %c0_47, %c0_48] : memref<4x8x8xf32, #tpu.memory_space<vmem>>, vector<1x8x8xf32>
    %59 = vector.shape_cast %58 : vector<1x8x8xf32> to vector<8x8xf32>
    %60 = vector.shape_cast %57 : vector<8x8xf32> to vector<1x8x8xf32>
    tpu.vector_store %arg16[%c2_46, %c0_47, %c0_48], %60 {strides = array<i32>} : memref<4x8x8xf32, #tpu.memory_space<vmem>>, vector<1x8x8xf32>,
    %61 = vector.extract_strided_slice %10 {offsets = [0, 24], sizes = [8, 8], strides = [1, 1]} : vector<8x32xf32> to vector<8x8xf32>
    %c3 = arith.constant 3 : index
    %c0_49 = arith.constant 0 : index
    %c0_50 = arith.constant 0 : index
    %62 = vector.load %arg14[%c3, %c0_49, %c0_50] : memref<4x8x8xf32, #tpu.memory_space<vmem>>, vector<1x8x8xf32>
    %63 = vector.shape_cast %62 : vector<1x8x8xf32> to vector<8x8xf32>
    %64 = vector.shape_cast %61 : vector<8x8xf32> to vector<1x8x8xf32>
    tpu.vector_store %arg14[%c3, %c0_49, %c0_50], %64 {strides = array<i32>} : memref<4x8x8xf32, #tpu.memory_space<vmem>>, vector<1x8x8xf32>,
    %65 = vector.extract_strided_slice %17 {offsets = [0, 24], sizes = [8, 8], strides = [1, 1]} : vector<8x32xf32> to vector<8x8xf32>
    %c3_51 = arith.constant 3 : index
    %c0_52 = arith.constant 0 : index
    %c0_53 = arith.constant 0 : index
    %66 = vector.load %arg15[%c3_51, %c0_52, %c0_53] : memref<4x8x8xf32, #tpu.memory_space<vmem>>, vector<1x8x8xf32>
    %67 = vector.shape_cast %66 : vector<1x8x8xf32> to vector<8x8xf32>
    %68 = vector.shape_cast %65 : vector<8x8xf32> to vector<1x8x8xf32>
    tpu.vector_store %arg15[%c3_51, %c0_52, %c0_53], %68 {strides = array<i32>} : memref<4x8x8xf32, #tpu.memory_space<vmem>>, vector<1x8x8xf32>,
    %69 = vector.extract_strided_slice %24 {offsets = [0, 24], sizes = [8, 8], strides = [1, 1]} : vector<8x32xf32> to vector<8x8xf32>
    %c3_54 = arith.constant 3 : index
    %c0_55 = arith.constant 0 : index
    %c0_56 = arith.constant 0 : index
    %70 = vector.load %arg16[%c3_54, %c0_55, %c0_56] : memref<4x8x8xf32, #tpu.memory_space<vmem>>, vector<1x8x8xf32>
    %71 = vector.shape_cast %70 : vector<1x8x8xf32> to vector<8x8xf32>
    %72 = vector.shape_cast %69 : vector<8x8xf32> to vector<1x8x8xf32>
    tpu.vector_store %arg16[%c3_54, %c0_55, %c0_56], %72 {strides = array<i32>} : memref<4x8x8xf32, #tpu.memory_space<vmem>>, vector<1x8x8xf32>,
    %c0_57 = arith.constant 0 : index
    %c0_58 = arith.constant 0 : index
    %c0_59 = arith.constant 0 : index
    %73 = vector.load %arg14[%c0_57, %c0_58, %c0_59] : memref<4x8x8xf32, #tpu.memory_space<vmem>>, vector<4x8x8xf32>
    %74 = arith.truncf %73 : vector<4x8x8xf32> to vector<4x8x8xbf16>
    %c0_60 = arith.constant 0 : index
    %c0_61 = arith.constant 0 : index
    %c0_62 = arith.constant 0 : index
    %75 = vector.load %arg15[%c0_60, %c0_61, %c0_62] : memref<4x8x8xf32, #tpu.memory_space<vmem>>, vector<4x8x8xf32>
    %c0_63 = arith.constant 0 : index
    %c0_64 = arith.constant 0 : index
    %c0_65 = arith.constant 0 : index
    %76 = vector.load %arg16[%c0_63, %c0_64, %c0_65] : memref<4x8x8xf32, #tpu.memory_space<vmem>>, vector<4x8x8xf32>
    %77 = arith.truncf %75 : vector<4x8x8xf32> to vector<4x8x8xbf16>
    %78 = arith.truncf %76 : vector<4x8x8xf32> to vector<4x8x8xbf16>
    "tpu.trace_start"() <{level = 10 : i32, message = "hqd,hkd->hqk"}> : () -> ()
    %cst_66 = arith.constant dense<0.000000e+00> : vector<4x8x8xf32>
    %79 = tpu.matmul %74, %77, %cst_66 {dimension_numbers = #tpu.dot_dimension_numbers<[2], [2], [1], [1], [0, 0, 0, 1, 1, 1], [0], [0]>} : vector<4x8x8xbf16>, vector<4x8x8xbf16>, vector<4x8x8xf32> -> vector<4x8x8xf32>
    "tpu.trace_stop"() : () -> ()
    %cst_67 = arith.constant dense<0xFF800000> : vector<4x8xf32>
    %80 = vector.multi_reduction <maximumf>, %79, %cst_67 [2] : vector<4x8x8xf32> to vector<4x8xf32>
    %81 = vector.shape_cast %80 : vector<4x8xf32> to vector<4x8x1xf32>
    %82 = vector.broadcast %81 : vector<4x8x1xf32> to vector<4x8x8xf32>
    %83 = arith.subf %79, %82 : vector<4x8x8xf32>
    %84 = math.exp %83 : vector<4x8x8xf32>
    %cst_68 = arith.constant dense<0.000000e+00> : vector<4x8xf32>
    %85 = vector.multi_reduction <add>, %84, %cst_68 [2] : vector<4x8x8xf32> to vector<4x8xf32>
    %86 = vector.shape_cast %85 : vector<4x8xf32> to vector<4x8x1xf32>
    %87 = arith.truncf %84 : vector<4x8x8xf32> to vector<4x8x8xbf16>
    "tpu.trace_start"() <{level = 10 : i32, message = "hqk,hkd->hqd"}> : () -> ()
    %cst_69 = arith.constant dense<0.000000e+00> : vector<4x8x8xf32>
    %88 = tpu.matmul %87, %78, %cst_69 {dimension_numbers = #tpu.dot_dimension_numbers<[2], [1], [1], [2], [0, 0, 0, 1, 1, 2], [0], [0]>} : vector<4x8x8xbf16>, vector<4x8x8xbf16>, vector<4x8x8xf32> -> vector<4x8x8xf32>
    "tpu.trace_stop"() : () -> ()
    %89 = tpu.reciprocal %86 {approx = true} : vector<4x8x1xf32> -> vector<4x8x1xf32>
    %90 = vector.broadcast %89 : vector<4x8x1xf32> to vector<4x8x8xf32>
    %91 = arith.mulf %88, %90 : vector<4x8x8xf32>
    %c0_70 = arith.constant 0 : index
    %c0_71 = arith.constant 0 : index
    %c0_72 = arith.constant 0 : index
    %92 = tpu.strided_load %arg15[%c0_70, %c0_71, %c0_72] {strides = array<i32: 1, 2, 1>} : memref<4x8x8xf32, #tpu.memory_space<vmem>>, vector<4x4x8xf32>
    %c0_73 = arith.constant 0 : index
    %c0_74 = arith.constant 0 : index
    %c0_75 = arith.constant 0 : index
    %93 = tpu.strided_load %arg16[%c0_73, %c0_74, %c0_75] {strides = array<i32: 1, 2, 1>} : memref<4x8x8xf32, #tpu.memory_space<vmem>>, vector<4x4x8xf32>
    %c0_76 = arith.constant 0 : index
    %c1_77 = arith.constant 1 : index
    %c0_78 = arith.constant 0 : index
    %94 = tpu.strided_load %arg15[%c0_76, %c1_77, %c0_78] {strides = array<i32: 1, 2, 1>} : memref<4x8x8xf32, #tpu.memory_space<vmem>>, vector<4x4x8xf32>
    %95 = arith.addf %92, %94 : vector<4x4x8xf32>
    %c0_79 = arith.constant 0 : index
    %c1_80 = arith.constant 1 : index
    %c0_81 = arith.constant 0 : index
    %96 = tpu.strided_load %arg16[%c0_79, %c1_80, %c0_81] {strides = array<i32: 1, 2, 1>} : memref<4x8x8xf32, #tpu.memory_space<vmem>>, vector<4x4x8xf32>
    %97 = arith.addf %93, %96 : vector<4x4x8xf32>
    %cst_82 = arith.constant 5.000000e-01 : f32
    %98 = vector.broadcast %cst_82 : f32 to vector<4x4x8xf32>
    %99 = arith.mulf %95, %98 : vector<4x4x8xf32>
    %cst_83 = arith.constant 5.000000e-01 : f32
    %100 = vector.broadcast %cst_83 : f32 to vector<4x4x8xf32>
    %101 = arith.mulf %97, %100 : vector<4x4x8xf32>
    %102 = arith.truncf %99 : vector<4x4x8xf32> to vector<4x4x8xbf16>
    %103 = arith.truncf %101 : vector<4x4x8xf32> to vector<4x4x8xbf16>
    "tpu.trace_start"() <{level = 10 : i32, message = "hqd,hkd->hqk"}> : () -> ()
    %cst_84 = arith.constant dense<0.000000e+00> : vector<4x8x4xf32>
    %104 = tpu.matmul %74, %102, %cst_84 {dimension_numbers = #tpu.dot_dimension_numbers<[2], [2], [1], [1], [0, 0, 0, 1, 1, 1], [0], [0]>} : vector<4x8x8xbf16>, vector<4x4x8xbf16>, vector<4x8x4xf32> -> vector<4x8x4xf32>
    "tpu.trace_stop"() : () -> ()
    %cst_85 = arith.constant dense<0xFF800000> : vector<4x8xf32>
    %105 = vector.multi_reduction <maximumf>, %104, %cst_85 [2] : vector<4x8x4xf32> to vector<4x8xf32>
    %106 = vector.shape_cast %105 : vector<4x8xf32> to vector<4x8x1xf32>
    %107 = vector.broadcast %106 : vector<4x8x1xf32> to vector<4x8x4xf32>
    %108 = arith.subf %104, %107 : vector<4x8x4xf32>
    %109 = math.exp %108 : vector<4x8x4xf32>
    %cst_86 = arith.constant dense<0.000000e+00> : vector<4x8xf32>
    %110 = vector.multi_reduction <add>, %109, %cst_86 [2] : vector<4x8x4xf32> to vector<4x8xf32>
    %111 = vector.shape_cast %110 : vector<4x8xf32> to vector<4x8x1xf32>
    %112 = arith.truncf %109 : vector<4x8x4xf32> to vector<4x8x4xbf16>
    "tpu.trace_start"() <{level = 10 : i32, message = "hqk,hkd->hqd"}> : () -> ()
    %cst_87 = arith.constant dense<0.000000e+00> : vector<4x8x8xf32>
    %113 = tpu.matmul %112, %103, %cst_87 {dimension_numbers = #tpu.dot_dimension_numbers<[2], [1], [1], [2], [0, 0, 0, 1, 1, 2], [0], [0]>} : vector<4x8x4xbf16>, vector<4x4x8xbf16>, vector<4x8x8xf32> -> vector<4x8x8xf32>
    "tpu.trace_stop"() : () -> ()
    %114 = tpu.reciprocal %111 {approx = true} : vector<4x8x1xf32> -> vector<4x8x1xf32>
    %115 = vector.broadcast %114 : vector<4x8x1xf32> to vector<4x8x8xf32>
    %116 = arith.mulf %113, %115 : vector<4x8x8xf32>
    %117 = arith.addf %91, %116 : vector<4x8x8xf32>
    %c0_88 = arith.constant 0 : index
    %c0_89 = arith.constant 0 : index
    %c0_90 = arith.constant 0 : index
    %118 = tpu.strided_load %arg15[%c0_88, %c0_89, %c0_90] {strides = array<i32: 1, 4, 1>} : memref<4x8x8xf32, #tpu.memory_space<vmem>>, vector<4x2x8xf32>
    %c0_91 = arith.constant 0 : index
    %c0_92 = arith.constant 0 : index
    %c0_93 = arith.constant 0 : index
    %119 = tpu.strided_load %arg16[%c0_91, %c0_92, %c0_93] {strides = array<i32: 1, 4, 1>} : memref<4x8x8xf32, #tpu.memory_space<vmem>>, vector<4x2x8xf32>
    %c0_94 = arith.constant 0 : index
    %c1_95 = arith.constant 1 : index
    %c0_96 = arith.constant 0 : index
    %120 = tpu.strided_load %arg15[%c0_94, %c1_95, %c0_96] {strides = array<i32: 1, 4, 1>} : memref<4x8x8xf32, #tpu.memory_space<vmem>>, vector<4x2x8xf32>
    %121 = arith.addf %118, %120 : vector<4x2x8xf32>
    %c0_97 = arith.constant 0 : index
    %c1_98 = arith.constant 1 : index
    %c0_99 = arith.constant 0 : index
    %122 = tpu.strided_load %arg16[%c0_97, %c1_98, %c0_99] {strides = array<i32: 1, 4, 1>} : memref<4x8x8xf32, #tpu.memory_space<vmem>>, vector<4x2x8xf32>
    %123 = arith.addf %119, %122 : vector<4x2x8xf32>
    %c0_100 = arith.constant 0 : index
    %c2_101 = arith.constant 2 : index
    %c0_102 = arith.constant 0 : index
    %124 = tpu.strided_load %arg15[%c0_100, %c2_101, %c0_102] {strides = array<i32: 1, 4, 1>} : memref<4x8x8xf32, #tpu.memory_space<vmem>>, vector<4x2x8xf32>
    %125 = arith.addf %121, %124 : vector<4x2x8xf32>
    %c0_103 = arith.constant 0 : index
    %c2_104 = arith.constant 2 : index
    %c0_105 = arith.constant 0 : index
    %126 = tpu.strided_load %arg16[%c0_103, %c2_104, %c0_105] {strides = array<i32: 1, 4, 1>} : memref<4x8x8xf32, #tpu.memory_space<vmem>>, vector<4x2x8xf32>
    %127 = arith.addf %123, %126 : vector<4x2x8xf32>
    %c0_106 = arith.constant 0 : index
    %c3_107 = arith.constant 3 : index
    %c0_108 = arith.constant 0 : index
    %128 = tpu.strided_load %arg15[%c0_106, %c3_107, %c0_108] {strides = array<i32: 1, 4, 1>} : memref<4x8x8xf32, #tpu.memory_space<vmem>>, vector<4x2x8xf32>
    %129 = arith.addf %125, %128 : vector<4x2x8xf32>
    %c0_109 = arith.constant 0 : index
    %c3_110 = arith.constant 3 : index
    %c0_111 = arith.constant 0 : index
    %130 = tpu.strided_load %arg16[%c0_109, %c3_110, %c0_111] {strides = array<i32: 1, 4, 1>} : memref<4x8x8xf32, #tpu.memory_space<vmem>>, vector<4x2x8xf32>
    %131 = arith.addf %127, %130 : vector<4x2x8xf32>
    %cst_112 = arith.constant 2.500000e-01 : f32
    %132 = vector.broadcast %cst_112 : f32 to vector<4x2x8xf32>
    %133 = arith.mulf %129, %132 : vector<4x2x8xf32>
    %cst_113 = arith.constant 2.500000e-01 : f32
    %134 = vector.broadcast %cst_113 : f32 to vector<4x2x8xf32>
    %135 = arith.mulf %131, %134 : vector<4x2x8xf32>
    %136 = arith.truncf %133 : vector<4x2x8xf32> to vector<4x2x8xbf16>
    %137 = arith.truncf %135 : vector<4x2x8xf32> to vector<4x2x8xbf16>
    "tpu.trace_start"() <{level = 10 : i32, message = "hqd,hkd->hqk"}> : () -> ()
    %cst_114 = arith.constant dense<0.000000e+00> : vector<4x8x2xf32>
    %138 = tpu.matmul %74, %136, %cst_114 {dimension_numbers = #tpu.dot_dimension_numbers<[2], [2], [1], [1], [0, 0, 0, 1, 1, 1], [0], [0]>} : vector<4x8x8xbf16>, vector<4x2x8xbf16>, vector<4x8x2xf32> -> vector<4x8x2xf32>
    "tpu.trace_stop"() : () -> ()
    %cst_115 = arith.constant dense<0xFF800000> : vector<4x8xf32>
    %139 = vector.multi_reduction <maximumf>, %138, %cst_115 [2] : vector<4x8x2xf32> to vector<4x8xf32>
    %140 = vector.shape_cast %139 : vector<4x8xf32> to vector<4x8x1xf32>
    %141 = vector.broadcast %140 : vector<4x8x1xf32> to vector<4x8x2xf32>
    %142 = arith.subf %138, %141 : vector<4x8x2xf32>
    %143 = math.exp %142 : vector<4x8x2xf32>
    %cst_116 = arith.constant dense<0.000000e+00> : vector<4x8xf32>
    %144 = vector.multi_reduction <add>, %143, %cst_116 [2] : vector<4x8x2xf32> to vector<4x8xf32>
    %145 = vector.shape_cast %144 : vector<4x8xf32> to vector<4x8x1xf32>
    %146 = arith.truncf %143 : vector<4x8x2xf32> to vector<4x8x2xbf16>
    "tpu.trace_start"() <{level = 10 : i32, message = "hqk,hkd->hqd"}> : () -> ()
    %cst_117 = arith.constant dense<0.000000e+00> : vector<4x8x8xf32>
    %147 = tpu.matmul %146, %137, %cst_117 {dimension_numbers = #tpu.dot_dimension_numbers<[2], [1], [1], [2], [0, 0, 0, 1, 1, 2], [0], [0]>} : vector<4x8x2xbf16>, vector<4x2x8xbf16>, vector<4x8x8xf32> -> vector<4x8x8xf32>
    "tpu.trace_stop"() : () -> ()
    %148 = tpu.reciprocal %145 {approx = true} : vector<4x8x1xf32> -> vector<4x8x1xf32>
    %149 = vector.broadcast %148 : vector<4x8x1xf32> to vector<4x8x8xf32>
    %150 = arith.mulf %147, %149 : vector<4x8x8xf32>
    %151 = arith.addf %117, %150 : vector<4x8x8xf32>
    %cst_118 = arith.constant 0.333333343 : f32
    %152 = vector.broadcast %cst_118 : f32 to vector<4x8x8xf32>
    %153 = arith.mulf %151, %152 : vector<4x8x8xf32>
    %c0_119 = arith.constant 0 : index
    %c0_120 = arith.constant 0 : index
    %c0_121 = arith.constant 0 : index
    %154 = vector.load %arg17[%c0_119, %c0_120, %c0_121] : memref<4x8x8xf32, #tpu.memory_space<vmem>>, vector<4x8x8xf32>
    tpu.vector_store %arg17[%c0_119, %c0_120, %c0_121], %153 {strides = array<i32>} : memref<4x8x8xf32, #tpu.memory_space<vmem>>, vector<4x8x8xf32>,
    %c0_122 = arith.constant 0 : index
    %c0_123 = arith.constant 0 : index
    %c0_124 = arith.constant 0 : index
    %155 = vector.load %arg15[%c0_122, %c0_123, %c0_124] : memref<4x8x8xf32, #tpu.memory_space<vmem>>, vector<4x4x8xf32>
    %c0_125 = arith.constant 0 : index
    %c0_126 = arith.constant 0 : index
    %c0_127 = arith.constant 0 : index
    %156 = vector.load %arg16[%c0_125, %c0_126, %c0_127] : memref<4x8x8xf32, #tpu.memory_space<vmem>>, vector<4x4x8xf32>
    %157 = vector.extract_strided_slice %74 {offsets = [0, 0, 0], sizes = [4, 4, 8], strides = [1, 1, 1]} : vector<4x8x8xbf16> to vector<4x4x8xbf16>
    %158 = arith.truncf %155 : vector<4x4x8xf32> to vector<4x4x8xbf16>
    %159 = arith.truncf %156 : vector<4x4x8xf32> to vector<4x4x8xbf16>
    "tpu.trace_start"() <{level = 10 : i32, message = "hqd,hkd->hqk"}> : () -> ()
    %cst_128 = arith.constant dense<0.000000e+00> : vector<4x4x4xf32>
    %160 = tpu.matmul %157, %158, %cst_128 {dimension_numbers = #tpu.dot_dimension_numbers<[2], [2], [1], [1], [0, 0, 0, 1, 1, 1], [0], [0]>} : vector<4x4x8xbf16>, vector<4x4x8xbf16>, vector<4x4x4xf32> -> vector<4x4x4xf32>
    "tpu.trace_stop"() : () -> ()
    %cst_129 = arith.constant dense<0xFF800000> : vector<4x4xf32>
    %161 = vector.multi_reduction <maximumf>, %160, %cst_129 [2] : vector<4x4x4xf32> to vector<4x4xf32>
    %162 = vector.shape_cast %161 : vector<4x4xf32> to vector<4x4x1xf32>
    %163 = vector.broadcast %162 : vector<4x4x1xf32> to vector<4x4x4xf32>
    %164 = arith.subf %160, %163 : vector<4x4x4xf32>
    %165 = math.exp %164 : vector<4x4x4xf32>
    %cst_130 = arith.constant dense<0.000000e+00> : vector<4x4xf32>
    %166 = vector.multi_reduction <add>, %165, %cst_130 [2] : vector<4x4x4xf32> to vector<4x4xf32>
    %167 = vector.shape_cast %166 : vector<4x4xf32> to vector<4x4x1xf32>
    %168 = arith.truncf %165 : vector<4x4x4xf32> to vector<4x4x4xbf16>
    "tpu.trace_start"() <{level = 10 : i32, message = "hqk,hkd->hqd"}> : () -> ()
    %cst_131 = arith.constant dense<0.000000e+00> : vector<4x4x8xf32>
    %169 = tpu.matmul %168, %159, %cst_131 {dimension_numbers = #tpu.dot_dimension_numbers<[2], [1], [1], [2], [0, 0, 0, 1, 1, 2], [0], [0]>} : vector<4x4x4xbf16>, vector<4x4x8xbf16>, vector<4x4x8xf32> -> vector<4x4x8xf32>
    "tpu.trace_stop"() : () -> ()
    %170 = tpu.reciprocal %167 {approx = true} : vector<4x4x1xf32> -> vector<4x4x1xf32>
    %171 = vector.broadcast %170 : vector<4x4x1xf32> to vector<4x4x8xf32>
    %172 = arith.mulf %169, %171 : vector<4x4x8xf32>
    %c0_132 = arith.constant 0 : index
    %c0_133 = arith.constant 0 : index
    %c0_134 = arith.constant 0 : index
    %173 = vector.load %arg17[%c0_132, %c0_133, %c0_134] : memref<4x8x8xf32, #tpu.memory_space<vmem>>, vector<4x4x8xf32>
    %174 = arith.addf %173, %172 : vector<4x4x8xf32>
    %c0_135 = arith.constant 0 : index
    %c0_136 = arith.constant 0 : index
    %c0_137 = arith.constant 0 : index
    %175 = vector.load %arg17[%c0_135, %c0_136, %c0_137] : memref<4x8x8xf32, #tpu.memory_space<vmem>>, vector<4x4x8xf32>
    tpu.vector_store %arg17[%c0_135, %c0_136, %c0_137], %174 {strides = array<i32>} : memref<4x8x8xf32, #tpu.memory_space<vmem>>, vector<4x4x8xf32>,
    %c0_138 = arith.constant 0 : index
    %c4 = arith.constant 4 : index
    %c0_139 = arith.constant 0 : index
    %176 = vector.load %arg15[%c0_138, %c4, %c0_139] : memref<4x8x8xf32, #tpu.memory_space<vmem>>, vector<4x4x8xf32>
    %c0_140 = arith.constant 0 : index
    %c4_141 = arith.constant 4 : index
    %c0_142 = arith.constant 0 : index
    %177 = vector.load %arg16[%c0_140, %c4_141, %c0_142] : memref<4x8x8xf32, #tpu.memory_space<vmem>>, vector<4x4x8xf32>
    %178 = vector.extract_strided_slice %74 {offsets = [0, 4, 0], sizes = [4, 4, 8], strides = [1, 1, 1]} : vector<4x8x8xbf16> to vector<4x4x8xbf16>
    %179 = arith.truncf %176 : vector<4x4x8xf32> to vector<4x4x8xbf16>
    %180 = arith.truncf %177 : vector<4x4x8xf32> to vector<4x4x8xbf16>
    "tpu.trace_start"() <{level = 10 : i32, message = "hqd,hkd->hqk"}> : () -> ()
    %cst_143 = arith.constant dense<0.000000e+00> : vector<4x4x4xf32>
    %181 = tpu.matmul %178, %179, %cst_143 {dimension_numbers = #tpu.dot_dimension_numbers<[2], [2], [1], [1], [0, 0, 0, 1, 1, 1], [0], [0]>} : vector<4x4x8xbf16>, vector<4x4x8xbf16>, vector<4x4x4xf32> -> vector<4x4x4xf32>
    "tpu.trace_stop"() : () -> ()
    %cst_144 = arith.constant dense<0xFF800000> : vector<4x4xf32>
    %182 = vector.multi_reduction <maximumf>, %181, %cst_144 [2] : vector<4x4x4xf32> to vector<4x4xf32>
    %183 = vector.shape_cast %182 : vector<4x4xf32> to vector<4x4x1xf32>
    %184 = vector.broadcast %183 : vector<4x4x1xf32> to vector<4x4x4xf32>
    %185 = arith.subf %181, %184 : vector<4x4x4xf32>
    %186 = math.exp %185 : vector<4x4x4xf32>
    %cst_145 = arith.constant dense<0.000000e+00> : vector<4x4xf32>
    %187 = vector.multi_reduction <add>, %186, %cst_145 [2] : vector<4x4x4xf32> to vector<4x4xf32>
    %188 = vector.shape_cast %187 : vector<4x4xf32> to vector<4x4x1xf32>
    %189 = arith.truncf %186 : vector<4x4x4xf32> to vector<4x4x4xbf16>
    "tpu.trace_start"() <{level = 10 : i32, message = "hqk,hkd->hqd"}> : () -> ()
    %cst_146 = arith.constant dense<0.000000e+00> : vector<4x4x8xf32>
    %190 = tpu.matmul %189, %180, %cst_146 {dimension_numbers = #tpu.dot_dimension_numbers<[2], [1], [1], [2], [0, 0, 0, 1, 1, 2], [0], [0]>} : vector<4x4x4xbf16>, vector<4x4x8xbf16>, vector<4x4x8xf32> -> vector<4x4x8xf32>
    "tpu.trace_stop"() : () -> ()
    %191 = tpu.reciprocal %188 {approx = true} : vector<4x4x1xf32> -> vector<4x4x1xf32>
    %192 = vector.broadcast %191 : vector<4x4x1xf32> to vector<4x4x8xf32>
    %193 = arith.mulf %190, %192 : vector<4x4x8xf32>
    %c0_147 = arith.constant 0 : index
    %c4_148 = arith.constant 4 : index
    %c0_149 = arith.constant 0 : index
    %194 = vector.load %arg17[%c0_147, %c4_148, %c0_149] : memref<4x8x8xf32, #tpu.memory_space<vmem>>, vector<4x4x8xf32>
    %195 = arith.addf %194, %193 : vector<4x4x8xf32>
    %c0_150 = arith.constant 0 : index
    %c4_151 = arith.constant 4 : index
    %c0_152 = arith.constant 0 : index
    %196 = vector.load %arg17[%c0_150, %c4_151, %c0_152] : memref<4x8x8xf32, #tpu.memory_space<vmem>>, vector<4x4x8xf32>
    tpu.vector_store %arg17[%c0_150, %c4_151, %c0_152], %195 {strides = array<i32>} : memref<4x8x8xf32, #tpu.memory_space<vmem>>, vector<4x4x8xf32>,
    %c0_153 = arith.constant 0 : index
    %c0_154 = arith.constant 0 : index
    %c0_155 = arith.constant 0 : index
    %197 = vector.load %arg17[%c0_153, %c0_154, %c0_155] : memref<4x8x8xf32, #tpu.memory_space<vmem>>, vector<4x8x8xf32>
    %198 = vector.extract_strided_slice %197 {offsets = [0, 0, 0], sizes = [1, 8, 8], strides = [1, 1, 1]} : vector<4x8x8xf32> to vector<1x8x8xf32>
    %199 = vector.shape_cast %198 : vector<1x8x8xf32> to vector<8x8xf32>
    %c0_156 = arith.constant 0 : index
    %c0_157 = arith.constant 0 : index
    %200 = vector.load %arg18[%c0_156, %c0_157] : memref<8x32xf32, #tpu.memory_space<vmem>>, vector<8x8xf32>
    tpu.vector_store %arg18[%c0_156, %c0_157], %199 {strides = array<i32>} : memref<8x32xf32, #tpu.memory_space<vmem>>, vector<8x8xf32>,
    %201 = vector.extract_strided_slice %197 {offsets = [1, 0, 0], sizes = [1, 8, 8], strides = [1, 1, 1]} : vector<4x8x8xf32> to vector<1x8x8xf32>
    %202 = vector.shape_cast %201 : vector<1x8x8xf32> to vector<8x8xf32>
    %c0_158 = arith.constant 0 : index
    %c8 = arith.constant 8 : index
    %203 = vector.load %arg18[%c0_158, %c8] : memref<8x32xf32, #tpu.memory_space<vmem>>, vector<8x8xf32>
    tpu.vector_store %arg18[%c0_158, %c8], %202 {strides = array<i32>} : memref<8x32xf32, #tpu.memory_space<vmem>>, vector<8x8xf32>,
    %204 = vector.extract_strided_slice %197 {offsets = [2, 0, 0], sizes = [1, 8, 8], strides = [1, 1, 1]} : vector<4x8x8xf32> to vector<1x8x8xf32>
    %205 = vector.shape_cast %204 : vector<1x8x8xf32> to vector<8x8xf32>
    %c0_159 = arith.constant 0 : index
    %c16 = arith.constant 16 : index
    %206 = vector.load %arg18[%c0_159, %c16] : memref<8x32xf32, #tpu.memory_space<vmem>>, vector<8x8xf32>
    tpu.vector_store %arg18[%c0_159, %c16], %205 {strides = array<i32>} : memref<8x32xf32, #tpu.memory_space<vmem>>, vector<8x8xf32>,
    %207 = vector.extract_strided_slice %197 {offsets = [3, 0, 0], sizes = [1, 8, 8], strides = [1, 1, 1]} : vector<4x8x8xf32> to vector<1x8x8xf32>
    %208 = vector.shape_cast %207 : vector<1x8x8xf32> to vector<8x8xf32>
    %c0_160 = arith.constant 0 : index
    %c24 = arith.constant 24 : index
    %209 = vector.load %arg18[%c0_160, %c24] : memref<8x32xf32, #tpu.memory_space<vmem>>, vector<8x8xf32>
    tpu.vector_store %arg18[%c0_160, %c24], %208 {strides = array<i32>} : memref<8x32xf32, #tpu.memory_space<vmem>>, vector<8x8xf32>,
    %c0_161 = arith.constant 0 : index
    %c0_162 = arith.constant 0 : index
    %210 = vector.load %arg18[%c0_161, %c0_162] : memref<8x32xf32, #tpu.memory_space<vmem>>, vector<8x32xf32>
    %211 = arith.truncf %210 : vector<8x32xf32> to vector<8x32xbf16>
    %cst_163 = arith.constant dense<0.000000e+00> : vector<8x32xf32>
    %212 = tpu.matmul %211, %3, %cst_163 {dimension_numbers = #tpu.dot_dimension_numbers<[1], [0], [0], [1], [0, 0, 1, 1], [], []>} : vector<8x32xbf16>, vector<32x32xbf16>, vector<8x32xf32> -> vector<8x32xf32>
    %c0_164 = arith.constant 0 : index
    %c0_165 = arith.constant 0 : index
    %213 = vector.load %arg11[%c0_164, %c0_165] : memref<1x32xf32, #tpu.memory_space<vmem>>, vector<1x32xf32>
    %cst_166 = arith.constant 2.000000e+00 : f32
    %214 = vector.broadcast %cst_166 : f32 to vector<1x32xf32>
    %215 = arith.mulf %214, %213 : vector<1x32xf32>
    %216 = vector.broadcast %215 : vector<1x32xf32> to vector<8x32xf32>
    %217 = arith.addf %212, %216 : vector<8x32xf32>
    %c0_167 = arith.constant 0 : index
    %c0_168 = arith.constant 0 : index
    %218 = vector.load %arg12[%c0_167, %c0_168] : memref<8x1xf32, #tpu.memory_space<vmem>>, vector<8x1xf32>
    %219 = arith.negf %218 : vector<8x1xf32>
    %220 = math.exp %219 : vector<8x1xf32>
    %cst_169 = arith.constant 1.000000e+00 : f32
    %221 = vector.broadcast %cst_169 : f32 to vector<8x1xf32>
    %222 = arith.addf %221, %220 : vector<8x1xf32>
    %223 = arith.divf %221, %222 : vector<8x1xf32>
    %224 = vector.broadcast %223 : vector<8x1xf32> to vector<8x32xf32>
    %225 = arith.mulf %217, %224 : vector<8x32xf32>
    %c0_170 = arith.constant 0 : index
    %c0_171 = arith.constant 0 : index
    %c0_172 = arith.constant 0 : index
    %226 = vector.load %arg13[%c0_170, %c0_171, %c0_172] : memref<1x8x32xf32, #tpu.memory_space<vmem>>, vector<1x8x32xf32>
    %227 = vector.shape_cast %226 : vector<1x8x32xf32> to vector<8x32xf32>
    %228 = vector.shape_cast %225 : vector<8x32xf32> to vector<1x8x32xf32>
    tpu.vector_store %arg13[%c0_170, %c0_171, %c0_172], %228 {strides = array<i32>} : memref<1x8x32xf32, #tpu.memory_space<vmem>>, vector<1x8x32xf32>,
    return
  }
  func.func @transform_0(%arg0: i32) -> (i32, i32, i32) {
    %c0_i32 = arith.constant 0 : i32
    %c0_i32_0 = arith.constant 0 : i32
    %c0_i32_1 = arith.constant 0 : i32
    return %arg0, %c0_i32, %c0_i32_0 : i32, i32, i32
  }
  func.func @transform_1(%arg0: i32) -> (i32, i32, i32) {
    %c0_i32 = arith.constant 0 : i32
    %c0_i32_0 = arith.constant 0 : i32
    %c0_i32_1 = arith.constant 0 : i32
    return %arg0, %c0_i32, %c0_i32_0 : i32, i32, i32
  }
  func.func @transform_2(%arg0: i32) -> (i32, i32, i32) {
    %c0_i32 = arith.constant 0 : i32
    %c0_i32_0 = arith.constant 0 : i32
    %c0_i32_1 = arith.constant 0 : i32
    return %arg0, %c0_i32, %c0_i32_0 : i32, i32, i32
  }
  func.func @transform_3(%arg0: i32) -> (i32, i32) {
    %c0_i32 = arith.constant 0 : i32
    %c0_i32_0 = arith.constant 0 : i32
    %c0_i32_1 = arith.constant 0 : i32
    return %c0_i32, %c0_i32_0 : i32, i32
  }
  func.func @transform_4(%arg0: i32) -> (i32, i32) {
    %c0_i32 = arith.constant 0 : i32
    %c0_i32_0 = arith.constant 0 : i32
    %c0_i32_1 = arith.constant 0 : i32
    return %c0_i32, %c0_i32_0 : i32, i32
  }
  func.func @transform_5(%arg0: i32) -> (i32, i32) {
    %c0_i32 = arith.constant 0 : i32
    %c0_i32_0 = arith.constant 0 : i32
    %c0_i32_1 = arith.constant 0 : i32
    return %c0_i32, %c0_i32_0 : i32, i32
  }
  func.func @transform_6(%arg0: i32) -> (i32, i32) {
    %c0_i32 = arith.constant 0 : i32
    %c0_i32_0 = arith.constant 0 : i32
    %c0_i32_1 = arith.constant 0 : i32
    return %c0_i32, %c0_i32_0 : i32, i32
  }
  func.func @transform_7(%arg0: i32) -> (i32, i32) {
    %c0_i32 = arith.constant 0 : i32
    %c0_i32_0 = arith.constant 0 : i32
    %c0_i32_1 = arith.constant 0 : i32
    return %c0_i32, %c0_i32_0 : i32, i32
  }
  func.func @transform_8(%arg0: i32) -> (i32, i32) {
    %c0_i32 = arith.constant 0 : i32
    %c0_i32_0 = arith.constant 0 : i32
    %c0_i32_1 = arith.constant 0 : i32
    return %c0_i32, %c0_i32_0 : i32, i32
  }
  func.func @transform_9(%arg0: i32) -> (i32, i32) {
    %c0_i32 = arith.constant 0 : i32
    %c0_i32_0 = arith.constant 0 : i32
    %c0_i32_1 = arith.constant 0 : i32
    return %c0_i32, %c0_i32_0 : i32, i32
  }
  func.func @transform_10(%arg0: i32) -> (i32, i32) {
    %c0_i32 = arith.constant 0 : i32
    %c0_i32_0 = arith.constant 0 : i32
    %c0_i32_1 = arith.constant 0 : i32
    return %c0_i32, %c0_i32_0 : i32, i32
  }
  func.func @transform_11(%arg0: i32) -> (i32, i32) {
    %c0_i32 = arith.constant 0 : i32
    %c0_i32_0 = arith.constant 0 : i32
    %c0_i32_1 = arith.constant 0 : i32
    return %c0_i32, %c0_i32_0 : i32, i32
  }
  func.func @transform_12(%arg0: i32) -> (i32, i32, i32) {
    %c0_i32 = arith.constant 0 : i32
    %c0_i32_0 = arith.constant 0 : i32
    %c0_i32_1 = arith.constant 0 : i32
    return %arg0, %c0_i32, %c0_i32_0 : i32, i32, i32
  }
}

</mosaic_0001>

<llo_original>
// kernel: tpu_custom_call.1
$region0: #{tpu_custom_call.1}
  #allocation0 [shape = 'u32[]', space=smem, size = 0x4, offset = 0x4, fixed_abs, tag = 'smem constant byte address 0x4 - core index']
  #allocation1 [shape = 'u32[72,128]{1,0:T(1,128)}', space=vmem, size = 0x9000, scoped, tag = 'internal scratch']
  #allocation2 [shape = 'f32[4,8,8]{2,1,0:T(8,128)}', space=vmem, size = 0x4000, scoped, tag = 'scratch operand']
  #allocation3 [shape = 'f32[4,8,8]{2,1,0:T(8,128)}', space=vmem, size = 0x4000, scoped, tag = 'scratch operand']
  #allocation4 [shape = 'f32[4,8,8]{2,1,0:T(8,128)}', space=vmem, size = 0x4000, scoped, tag = 'scratch operand']
  #allocation5 [shape = 'f32[4,8,8]{2,1,0:T(8,128)}', space=vmem, size = 0x4000, scoped, tag = 'scratch operand']
  #allocation6 [shape = 'f32[8,32]{1,0:T(8,128)}', space=vmem, size = 0x1000, scoped, tag = 'scratch operand']
  %s0 = inlined_call_operand.hbm [shape: f32[2,8,32], index: 0, kind: input, shape index: {}]
  %s1 = inlined_call_operand.hbm [shape: f32[2,8,32], index: 1, kind: input, shape index: {}]
  %s2 = inlined_call_operand.hbm [shape: f32[2,8,32], index: 2, kind: input, shape index: {}]
  %s3 = inlined_call_operand.hbm [shape: bf16[32,32], index: 3, kind: input, shape index: {}]
  %s4 = inlined_call_operand.hbm [shape: bf16[32,32], index: 4, kind: input, shape index: {}]
  %s5 = inlined_call_operand.hbm [shape: bf16[32,32], index: 5, kind: input, shape index: {}]
  %s6 = inlined_call_operand.hbm [shape: bf16[32,32], index: 6, kind: input, shape index: {}]
  %s7 = inlined_call_operand.vmem [shape: f32[1,32], index: 7, kind: input, shape index: {}]
  %s8 = inlined_call_operand.vmem [shape: f32[1,32], index: 8, kind: input, shape index: {}]
  %s9 = inlined_call_operand.vmem [shape: f32[1,32], index: 9, kind: input, shape index: {}]
  %s10 = inlined_call_operand.vmem [shape: f32[1,32], index: 10, kind: input, shape index: {}]
  %s11 = inlined_call_operand.vmem [shape: f32[8,1], index: 11, kind: input, shape index: {}]
  %s12 = inlined_call_operand.hbm [shape: f32[2,8,32], index: 12, kind: output, shape index: {}]
  %s13 = sld [smem:[#allocation0]]
  $region109: #{tpu_custom_call.1} parent=0
    _
  %s15 = ssub.s32 1, %s13
  %s16 = scalar_select 0, %s15, %s13
  $region1: #{tpu_custom_call.1} parent=0
    #allocation7 [shape = 'u8[8192]{0}', space=vmem, size = 0x2000, scoped, tag = 'input window, operand 0']
    #allocation8 [shape = 's32[2]{0}', space=sflag, size = 0x8, scoped, tag = 'scoped memory for tpu_custom_call.1']
    #allocation9 [shape = 's32[2]{0}', space=sflag, size = 0x8, scoped, tag = 'scoped memory for tpu_custom_call.1']
    #allocation10 [shape = 'u8[8192]{0}', space=vmem, size = 0x2000, scoped, tag = 'input window, operand 1']
    #allocation11 [shape = 's32[2]{0}', space=sflag, size = 0x8, scoped, tag = 'scoped memory for tpu_custom_call.1']
    #allocation12 [shape = 'u8[8192]{0}', space=vmem, size = 0x2000, scoped, tag = 'input window, operand 2']
    #allocation13 [shape = 'u8[8192]{0}', space=vmem, size = 0x2000, scoped, tag = 'input window, operand 3, single buffered']
    #allocation14 [shape = 's32[1]{0}', space=sflag, size = 0x4, scoped, tag = 'scoped memory for tpu_custom_call.1']
    #allocation15 [shape = 'u8[8192]{0}', space=vmem, size = 0x2000, scoped, tag = 'input window, operand 4, single buffered']
    #allocation16 [shape = 'u8[8192]{0}', space=vmem, size = 0x2000, scoped, tag = 'input window, operand 5, single buffered']
    #allocation17 [shape = 's32[1]{0}', space=sflag, size = 0x4, scoped, tag = 'scoped memory for tpu_custom_call.1']
    #allocation18 [shape = 'u8[8192]{0}', space=vmem, size = 0x2000, scoped, tag = 'input window, operand 6, single buffered']
    #allocation19 [shape = 'u8[8192]{0}', space=vmem, size = 0x2000, scoped, tag = 'output window, operand 0']
    %17 = vsyncpa [#allocation8], 0
    %s18 = scalar_lea.sflag [#allocation8], 1
    %19 = vsyncpa %s18, 0
    %20 = vsyncpa [#allocation11], 0
    %s21 = scalar_lea.sflag [#allocation11], 1
    %22 = vsyncpa %s21, 0
    %23 = vsyncpa [#allocation14], 0
    %24 = vsyncpa [#allocation17], 0
    %25 = vsyncpa [#allocation9], 0
    %s26 = scalar_lea.sflag [#allocation9], 1
    %27 = vsyncpa %s26, 0
    loop: start=0, step=1, limit=4
    $region2: #{tpu_custom_call.1} parent=1 // loop_pre_header
      _
    $region3: #{tpu_custom_call.1} parent=1 // loop_header
      %s29 = sphi 0, %s33
      %p30 = scmp.ge.s32.totalorder %s29, 4
      %s39 = sphi 0, %s41
      %s42 = sphi 0, %s39
      %s43 = sphi 0, %s42
      %s59 = sphi 0, %s43
      %s65 = sphi 0, %s67
      %s68 = sphi 0, %s65
      %s69 = sphi 0, %s68
      %s85 = sphi 0, %s69
      %s91 = sphi 0, %s93
      %s94 = sphi 0, %s91
      %s95 = sphi 0, %s94
      %s111 = sphi 0, %s95
      %s115 = sphi 0, %s115
      %s117 = sphi 0, %s115
      %s118 = sphi 0, %s117
      %s132 = sphi 0, %s118
      %s136 = sphi 0, %s136
      %s138 = sphi 0, %s136
      %s139 = sphi 0, %s138
      %s153 = sphi 0, %s139
      %s157 = sphi 0, %s157
      %s159 = sphi 0, %s157
      %s160 = sphi 0, %s159
      %s174 = sphi 0, %s160
      %s178 = sphi 0, %s178
      %s180 = sphi 0, %s178
      %s181 = sphi 0, %s180
      %s195 = sphi 0, %s181
      %s199 = sphi 0, %s199
      %s201 = sphi 0, %s199
      %s202 = sphi 0, %s201
      %s216 = sphi 0, %s202
      %s220 = sphi 0, %s220
      %s222 = sphi 0, %s220
      %s223 = sphi 0, %s222
      %s237 = sphi 0, %s223
      %s241 = sphi 0, %s241
      %s243 = sphi 0, %s241
      %s244 = sphi 0, %s243
      %s258 = sphi 0, %s244
      %s262 = sphi 0, %s262
      %s264 = sphi 0, %s262
      %s265 = sphi 0, %s264
      %s279 = sphi 0, %s265
      %s283 = sphi 0, %s283
      %s285 = sphi 0, %s283
      %s286 = sphi 0, %s285
      %s300 = sphi 0, %s286
      %s306 = sphi 0, %s308
      %s309 = sphi 0, %s306
      %s310 = sphi 0, %s309
      %s326 = sphi 0, %s310
    $region4: #{tpu_custom_call.1} parent=1 // loop_header_branch
      %32 = sbr.rel (%p30) target = $region8
    $region5: #{tpu_custom_call.1} parent=1 // loop_body
      %s34 = ssub.s32 %s29, 1
      %s35 = ssub.s32 %s29, 2
      %s36 = sadd.s32 %s29, 1
      %s37 = ssub.s32 %s29, %s36
      %p38 = scmp.eq.s32.totalorder %s37, 0
      %s40 = sadd.s32 %s39, 1
      %s41 = scalar_select %p38, %s39, %s40
      %p44 = pneg %p38
      %p45 = scmp.eq.s32.totalorder %s29, 1
      %p46 = por %p44, %p45
      %p47 = scmp.ne.s32.totalorder %s39, %s42
      %p48 = scmp.eq.s32.totalorder %s29, 0
      %p49 = por %p47, %p48
      %p50 = scmp.ne.s32.totalorder %s39, %s42
      %p51 = scmp.eq.s32.totalorder %s34, 1
      %p52 = por %p50, %p51
      %p53 = scmp.ne.s32.totalorder %s42, %s43
      %p54 = scmp.eq.s32.totalorder %s34, 0
      %p55 = por %p53, %p54
      %p56 = scmp.ne.s32.totalorder %s42, %s43
      %p57 = scmp.eq.s32.totalorder %s35, 1
      %p58 = por %p56, %p57
      %p60 = scmp.ne.s32.totalorder %s43, %s59
      %p61 = scmp.eq.s32.totalorder %s35, 0
      %p62 = por %p60, %p61
      %s63 = ssub.s32 %s29, %s36
      %p64 = scmp.eq.s32.totalorder %s63, 0
      %s66 = sadd.s32 %s65, 1
      %s67 = scalar_select %p64, %s65, %s66
      %p70 = pneg %p64
      %p71 = scmp.eq.s32.totalorder %s29, 1
      %p72 = por %p70, %p71
      %p73 = scmp.ne.s32.totalorder %s65, %s68
      %p74 = scmp.eq.s32.totalorder %s29, 0
      %p75 = por %p73, %p74
      %p76 = scmp.ne.s32.totalorder %s65, %s68
      %p77 = scmp.eq.s32.totalorder %s34, 1
      %p78 = por %p76, %p77
      %p79 = scmp.ne.s32.totalorder %s68, %s69
      %p80 = scmp.eq.s32.totalorder %s34, 0
      %p81 = por %p79, %p80
      %p82 = scmp.ne.s32.totalorder %s68, %s69
      %p83 = scmp.eq.s32.totalorder %s35, 1
      %p84 = por %p82, %p83
      %p86 = scmp.ne.s32.totalorder %s69, %s85
      %p87 = scmp.eq.s32.totalorder %s35, 0
      %p88 = por %p86, %p87
      %s89 = ssub.s32 %s29, %s36
      %p90 = scmp.eq.s32.totalorder %s89, 0
      %s92 = sadd.s32 %s91, 1
      %s93 = scalar_select %p90, %s91, %s92
      %p96 = pneg %p90
      %p97 = scmp.eq.s32.totalorder %s29, 1
      %p98 = por %p96, %p97
      %p99 = scmp.ne.s32.totalorder %s91, %s94
      %p100 = scmp.eq.s32.totalorder %s29, 0
      %p101 = por %p99, %p100
      %p102 = scmp.ne.s32.totalorder %s91, %s94
      %p103 = scmp.eq.s32.totalorder %s34, 1
      %p104 = por %p102, %p103
      %p105 = scmp.ne.s32.totalorder %s94, %s95
      %p106 = scmp.eq.s32.totalorder %s34, 0
      %p107 = por %p105, %p106
      %p108 = scmp.ne.s32.totalorder %s94, %s95
      %p109 = scmp.eq.s32.totalorder %s35, 1
      %p110 = por %p108, %p109
      %p112 = scmp.ne.s32.totalorder %s95, %s111
      %p113 = scmp.eq.s32.totalorder %s35, 0
      %p114 = por %p112, %p113
      %s116 = sadd.s32 %s115, 1
      %p119 = scmp.eq.s32.totalorder %s29, 1
      %p120 = scmp.ne.s32.totalorder %s115, %s117
      %p121 = scmp.eq.s32.totalorder %s29, 0
      %p122 = por %p120, %p121
      %p123 = scmp.ne.s32.totalorder %s115, %s117
      %p124 = scmp.eq.s32.totalorder %s34, 1
      %p125 = por %p123, %p124
      %p126 = scmp.ne.s32.totalorder %s117, %s118
      %p127 = scmp.eq.s32.totalorder %s34, 0
      %p128 = por %p126, %p127
      %p129 = scmp.ne.s32.totalorder %s117, %s118
      %p130 = scmp.eq.s32.totalorder %s35, 1
      %p131 = por %p129, %p130
      %p133 = scmp.ne.s32.totalorder %s118, %s132
      %p134 = scmp.eq.s32.totalorder %s35, 0
      %p135 = por %p133, %p134
      %s137 = sadd.s32 %s136, 1
      %p140 = scmp.eq.s32.totalorder %s29, 1
      %p141 = scmp.ne.s32.totalorder %s136, %s138
      %p142 = scmp.eq.s32.totalorder %s29, 0
      %p143 = por %p141, %p142
      %p144 = scmp.ne.s32.totalorder %s136, %s138
      %p145 = scmp.eq.s32.totalorder %s34, 1
      %p146 = por %p144, %p145
      %p147 = scmp.ne.s32.totalorder %s138, %s139
      %p148 = scmp.eq.s32.totalorder %s34, 0
      %p149 = por %p147, %p148
      %p150 = scmp.ne.s32.totalorder %s138, %s139
      %p151 = scmp.eq.s32.totalorder %s35, 1
      %p152 = por %p150, %p151
      %p154 = scmp.ne.s32.totalorder %s139, %s153
      %p155 = scmp.eq.s32.totalorder %s35, 0
      %p156 = por %p154, %p155
      %s158 = sadd.s32 %s157, 1
      %p161 = scmp.eq.s32.totalorder %s29, 1
      %p162 = scmp.ne.s32.totalorder %s157, %s159
      %p163 = scmp.eq.s32.totalorder %s29, 0
      %p164 = por %p162, %p163
      %p165 = scmp.ne.s32.totalorder %s157, %s159
      %p166 = scmp.eq.s32.totalorder %s34, 1
      %p167 = por %p165, %p166
      %p168 = scmp.ne.s32.totalorder %s159, %s160
      %p169 = scmp.eq.s32.totalorder %s34, 0
      %p170 = por %p168, %p169
      %p171 = scmp.ne.s32.totalorder %s159, %s160
      %p172 = scmp.eq.s32.totalorder %s35, 1
      %p173 = por %p171, %p172
      %p175 = scmp.ne.s32.totalorder %s160, %s174
      %p176 = scmp.eq.s32.totalorder %s35, 0
      %p177 = por %p175, %p176
      %s179 = sadd.s32 %s178, 1
      %p182 = scmp.eq.s32.totalorder %s29, 1
      %p183 = scmp.ne.s32.totalorder %s178, %s180
      %p184 = scmp.eq.s32.totalorder %s29, 0
      %p185 = por %p183, %p184
      %p186 = scmp.ne.s32.totalorder %s178, %s180
      %p187 = scmp.eq.s32.totalorder %s34, 1
      %p188 = por %p186, %p187
      %p189 = scmp.ne.s32.totalorder %s180, %s181
      %p190 = scmp.eq.s32.totalorder %s34, 0
      %p191 = por %p189, %p190
      %p192 = scmp.ne.s32.totalorder %s180, %s181
      %p193 = scmp.eq.s32.totalorder %s35, 1
      %p194 = por %p192, %p193
      %p196 = scmp.ne.s32.totalorder %s181, %s195
      %p197 = scmp.eq.s32.totalorder %s35, 0
      %p198 = por %p196, %p197
      %s200 = sadd.s32 %s199, 1
      %p203 = scmp.eq.s32.totalorder %s29, 1
      %p204 = scmp.ne.s32.totalorder %s199, %s201
      %p205 = scmp.eq.s32.totalorder %s29, 0
      %p206 = por %p204, %p205
      %p207 = scmp.ne.s32.totalorder %s199, %s201
      %p208 = scmp.eq.s32.totalorder %s34, 1
      %p209 = por %p207, %p208
      %p210 = scmp.ne.s32.totalorder %s201, %s202
      %p211 = scmp.eq.s32.totalorder %s34, 0
      %p212 = por %p210, %p211
      %p213 = scmp.ne.s32.totalorder %s201, %s202
      %p214 = scmp.eq.s32.totalorder %s35, 1
      %p215 = por %p213, %p214
      %p217 = scmp.ne.s32.totalorder %s202, %s216
      %p218 = scmp.eq.s32.totalorder %s35, 0
      %p219 = por %p217, %p218
      %s221 = sadd.s32 %s220, 1
      %p224 = scmp.eq.s32.totalorder %s29, 1
      %p225 = scmp.ne.s32.totalorder %s220, %s222
      %p226 = scmp.eq.s32.totalorder %s29, 0
      %p227 = por %p225, %p226
      %p228 = scmp.ne.s32.totalorder %s220, %s222
      %p229 = scmp.eq.s32.totalorder %s34, 1
      %p230 = por %p228, %p229
      %p231 = scmp.ne.s32.totalorder %s222, %s223
      %p232 = scmp.eq.s32.totalorder %s34, 0
      %p233 = por %p231, %p232
      %p234 = scmp.ne.s32.totalorder %s222, %s223
      %p235 = scmp.eq.s32.totalorder %s35, 1
      %p236 = por %p234, %p235
      %p238 = scmp.ne.s32.totalorder %s223, %s237
      %p239 = scmp.eq.s32.totalorder %s35, 0
      %p240 = por %p238, %p239
      %s242 = sadd.s32 %s241, 1
      %p245 = scmp.eq.s32.totalorder %s29, 1
      %p246 = scmp.ne.s32.totalorder %s241, %s243
      %p247 = scmp.eq.s32.totalorder %s29, 0
      %p248 = por %p246, %p247
      %p249 = scmp.ne.s32.totalorder %s241, %s243
      %p250 = scmp.eq.s32.totalorder %s34, 1
      %p251 = por %p249, %p250
      %p252 = scmp.ne.s32.totalorder %s243, %s244
      %p253 = scmp.eq.s32.totalorder %s34, 0
      %p254 = por %p252, %p253
      %p255 = scmp.ne.s32.totalorder %s243, %s244
      %p256 = scmp.eq.s32.totalorder %s35, 1
      %p257 = por %p255, %p256
      %p259 = scmp.ne.s32.totalorder %s244, %s258
      %p260 = scmp.eq.s32.totalorder %s35, 0
      %p261 = por %p259, %p260
      %s263 = sadd.s32 %s262, 1
      %p266 = scmp.eq.s32.totalorder %s29, 1
      %p267 = scmp.ne.s32.totalorder %s262, %s264
      %p268 = scmp.eq.s32.totalorder %s29, 0
      %p269 = por %p267, %p268
      %p270 = scmp.ne.s32.totalorder %s262, %s264
      %p271 = scmp.eq.s32.totalorder %s34, 1
      %p272 = por %p270, %p271
      %p273 = scmp.ne.s32.totalorder %s264, %s265
      %p274 = scmp.eq.s32.totalorder %s34, 0
      %p275 = por %p273, %p274
      %p276 = scmp.ne.s32.totalorder %s264, %s265
      %p277 = scmp.eq.s32.totalorder %s35, 1
      %p278 = por %p276, %p277
      %p280 = scmp.ne.s32.totalorder %s265, %s279
      %p281 = scmp.eq.s32.totalorder %s35, 0
      %p282 = por %p280, %p281
      %s284 = sadd.s32 %s283, 1
      %p287 = scmp.eq.s32.totalorder %s29, 1
      %p288 = scmp.ne.s32.totalorder %s283, %s285
      %p289 = scmp.eq.s32.totalorder %s29, 0
      %p290 = por %p288, %p289
      %p291 = scmp.ne.s32.totalorder %s283, %s285
      %p292 = scmp.eq.s32.totalorder %s34, 1
      %p293 = por %p291, %p292
      %p294 = scmp.ne.s32.totalorder %s285, %s286
      %p295 = scmp.eq.s32.totalorder %s34, 0
      %p296 = por %p294, %p295
      %p297 = scmp.ne.s32.totalorder %s285, %s286
      %p298 = scmp.eq.s32.totalorder %s35, 1
      %p299 = por %p297, %p298
      %p301 = scmp.ne.s32.totalorder %s286, %s300
      %p302 = scmp.eq.s32.totalorder %s35, 0
      %p303 = por %p301, %p302
      %s304 = ssub.s32 %s29, %s36
      %p305 = scmp.eq.s32.totalorder %s304, 0
      %s307 = sadd.s32 %s306, 1
      %s308 = scalar_select %p305, %s306, %s307
      %p311 = pneg %p305
      %p312 = scmp.eq.s32.totalorder %s29, 1
      %p313 = por %p311, %p312
      %p314 = scmp.ne.s32.totalorder %s306, %s309
      %p315 = scmp.eq.s32.totalorder %s29, 0
      %p316 = por %p314, %p315
      %p317 = scmp.ne.s32.totalorder %s306, %s309
      %p318 = scmp.eq.s32.totalorder %s34, 1
      %p319 = por %p317, %p318
      %p320 = scmp.ne.s32.totalorder %s309, %s310
      %p321 = scmp.eq.s32.totalorder %s34, 0
      %p322 = por %p320, %p321
      %p323 = scmp.ne.s32.totalorder %s309, %s310
      %p324 = scmp.eq.s32.totalorder %s35, 1
      %p325 = por %p323, %p324
      %p327 = scmp.ne.s32.totalorder %s310, %s326
      %p328 = scmp.eq.s32.totalorder %s35, 0
      %p329 = por %p327, %p328
      %p330 = scmp.le.s32.totalorder 1, %s29
      %p331 = scmp.lt.s32.totalorder %s29, 3
      %p332 = pnand %p330, %p331
      %p333 = pneg %p332
      // Predicated region
      $region9: #{tpu_custom_call.1} parent=5 // pred_check
        _
      $region10: #{tpu_custom_call.1} parent=5 // pred_check_branch
        %335 = sbr.rel (%p332) target = $region12
      $region11: #{tpu_custom_call.1} parent=5 // pred_region
        %s336 = ssub.s32 %s29, 1
        // Predicated region
        $region13: #{tpu_custom_call.1} parent=11 // pred_check
          %p337 = pneg %p128
        $region14: #{tpu_custom_call.1} parent=11 // pred_check_branch
          %339 = sbr.rel (%p337) target = $region16
        $region15: #{tpu_custom_call.1} parent=11 // pred_region
          %341 = vsyncadd [#allocation14], 0
          %s342 = sshll.u32 %s3, 4
          %s343 = int_to_ptr.hbm [resolvable:$true] %s342
          %s344 = sshll.u32 [#allocation13], 4
          %s345 = int_to_ptr.vmem [resolvable:$true] %s344
          %350 = dma.hbm_to_vmem [thread:$0]  %s343, 256, %s345, [#allocation14], 64, 64, 4
        $region16: #{tpu_custom_call.1} parent=11 // pred_fallthru
          _
        // Predicated region
        $region17: #{tpu_custom_call.1} parent=11 // pred_check
          %p351 = pneg %p149
        $region18: #{tpu_custom_call.1} parent=11 // pred_check_branch
          %353 = sbr.rel (%p351) target = $region20
        $region19: #{tpu_custom_call.1} parent=11 // pred_region
          %355 = vsyncadd [#allocation14], 0
          %s356 = sshll.u32 %s4, 4
          %s357 = int_to_ptr.hbm [resolvable:$true] %s356
          %s358 = sshll.u32 [#allocation15], 4
          %s359 = int_to_ptr.vmem [resolvable:$true] %s358
          %364 = dma.hbm_to_vmem [thread:$0]  %s357, 256, %s359, [#allocation14], 64, 64, 4
        $region20: #{tpu_custom_call.1} parent=11 // pred_fallthru
          _
        // Predicated region
        $region21: #{tpu_custom_call.1} parent=11 // pred_check
          %p365 = pneg %p170
        $region22: #{tpu_custom_call.1} parent=11 // pred_check_branch
          %367 = sbr.rel (%p365) target = $region24
        $region23: #{tpu_custom_call.1} parent=11 // pred_region
          %369 = vsyncadd [#allocation17], 0
          %s370 = sshll.u32 %s5, 4
          %s371 = int_to_ptr.hbm [resolvable:$true] %s370
          %s372 = sshll.u32 [#allocation16], 4
          %s373 = int_to_ptr.vmem [resolvable:$true] %s372
          %378 = dma.hbm_to_vmem [thread:$0]  %s371, 256, %s373, [#allocation17], 64, 64, 4
        $region24: #{tpu_custom_call.1} parent=11 // pred_fallthru
          _
        // Predicated region
        $region25: #{tpu_custom_call.1} parent=11 // pred_check
          %p379 = pneg %p191
        $region26: #{tpu_custom_call.1} parent=11 // pred_check_branch
          %381 = sbr.rel (%p379) target = $region28
        $region27: #{tpu_custom_call.1} parent=11 // pred_region
          %383 = vsyncadd [#allocation17], 0
          %s384 = sshll.u32 %s6, 4
          %s385 = int_to_ptr.hbm [resolvable:$true] %s384
          %s386 = sshll.u32 [#allocation18], 4
          %s387 = int_to_ptr.vmem [resolvable:$true] %s386
          %392 = dma.hbm_to_vmem [thread:$0]  %s385, 256, %s387, [#allocation17], 64, 64, 4
        $region28: #{tpu_custom_call.1} parent=11 // pred_fallthru
          _
        // Predicated region
        $region29: #{tpu_custom_call.1} parent=11 // pred_check
          %p393 = pneg %p212
        $region30: #{tpu_custom_call.1} parent=11 // pred_check_branch
          %395 = sbr.rel (%p393) target = $region32
        $region31: #{tpu_custom_call.1} parent=11 // pred_region
          _
        $region32: #{tpu_custom_call.1} parent=11 // pred_fallthru
          _
        // Predicated region
        $region33: #{tpu_custom_call.1} parent=11 // pred_check
          %p396 = pneg %p233
        $region34: #{tpu_custom_call.1} parent=11 // pred_check_branch
          %398 = sbr.rel (%p396) target = $region36
        $region35: #{tpu_custom_call.1} parent=11 // pred_region
          _
        $region36: #{tpu_custom_call.1} parent=11 // pred_fallthru
          _
        // Predicated region
        $region37: #{tpu_custom_call.1} parent=11 // pred_check
          %p399 = pneg %p254
        $region38: #{tpu_custom_call.1} parent=11 // pred_check_branch
          %401 = sbr.rel (%p399) target = $region40
        $region39: #{tpu_custom_call.1} parent=11 // pred_region
          _
        $region40: #{tpu_custom_call.1} parent=11 // pred_fallthru
          _
        // Predicated region
        $region41: #{tpu_custom_call.1} parent=11 // pred_check
          %p402 = pneg %p275
        $region42: #{tpu_custom_call.1} parent=11 // pred_check_branch
          %404 = sbr.rel (%p402) target = $region44
        $region43: #{tpu_custom_call.1} parent=11 // pred_region
          _
        $region44: #{tpu_custom_call.1} parent=11 // pred_fallthru
          _
        // Predicated region
        $region45: #{tpu_custom_call.1} parent=11 // pred_check
          %p405 = pneg %p296
        $region46: #{tpu_custom_call.1} parent=11 // pred_check_branch
          %407 = sbr.rel (%p405) target = $region48
        $region47: #{tpu_custom_call.1} parent=11 // pred_region
          _
        $region48: #{tpu_custom_call.1} parent=11 // pred_fallthru
          _
      $region12: #{tpu_custom_call.1} parent=5 // pred_fallthru
        _
      %p408 = scmp.lt.s32.totalorder %s29, 2
      // Predicated region
      $region49: #{tpu_custom_call.1} parent=5 // pred_check
        %p409 = pneg %p408
      $region50: #{tpu_custom_call.1} parent=5 // pred_check_branch
        %411 = sbr.rel (%p409) target = $region52
      $region51: #{tpu_custom_call.1} parent=5 // pred_region
        // Predicated region
        $region53: #{tpu_custom_call.1} parent=51 // pred_check
          %p412 = pneg %p49
        $region54: #{tpu_custom_call.1} parent=51 // pred_check_branch
          %414 = sbr.rel (%p412) target = $region56
        $region55: #{tpu_custom_call.1} parent=51 // pred_region
          %s415 = sand.u32 %s39, 1
          %s416 = scalar_lea.sflag [#allocation8], %s415
          %s417 = sand.u32 %s39, 1
          %s418 = smul.addr %s417, 8
          %s419 = scalar_lea.vmem [#allocation7], %s418
          %421 = vsyncadd %s416, 0
          %s422 = smul.addr %s29, 8
          %s423 = scalar_lea.hbm %s0, %s422
          %s425 = sshll.u32 %s423, 4
          %s426 = int_to_ptr.hbm [resolvable:$true] %s425
          %s427 = sshll.u32 %s419, 4
          %s428 = int_to_ptr.vmem [resolvable:$true] %s427
          %430 = dma.hbm_to_vmem [thread:$0]  %s426, 128, %s428, %s416
        $region56: #{tpu_custom_call.1} parent=51 // pred_fallthru
          _
        // Predicated region
        $region57: #{tpu_custom_call.1} parent=51 // pred_check
          %p431 = pneg %p75
        $region58: #{tpu_custom_call.1} parent=51 // pred_check_branch
          %433 = sbr.rel (%p431) target = $region60
        $region59: #{tpu_custom_call.1} parent=51 // pred_region
          %s434 = sand.u32 %s29, 1
          %s435 = scalar_lea.sflag [#allocation11], %s434
          %s436 = sand.u32 %s65, 1
          %s437 = smul.addr %s436, 8
          %s438 = scalar_lea.vmem [#allocation10], %s437
          %440 = vsyncadd %s435, 0
          %s441 = smul.addr %s29, 8
          %s442 = scalar_lea.hbm %s1, %s441
          %s444 = sshll.u32 %s442, 4
          %s445 = int_to_ptr.hbm [resolvable:$true] %s444
          %s446 = sshll.u32 %s438, 4
          %s447 = int_to_ptr.vmem [resolvable:$true] %s446
          %449 = dma.hbm_to_vmem [thread:$0]  %s445, 128, %s447, %s435
        $region60: #{tpu_custom_call.1} parent=51 // pred_fallthru
          _
        // Predicated region
        $region61: #{tpu_custom_call.1} parent=51 // pred_check
          %p450 = pneg %p101
        $region62: #{tpu_custom_call.1} parent=51 // pred_check_branch
          %452 = sbr.rel (%p450) target = $region64
        $region63: #{tpu_custom_call.1} parent=51 // pred_region
          %s453 = sand.u32 %s29, 1
          %s454 = scalar_lea.sflag [#allocation11], %s453
          %s455 = sand.u32 %s91, 1
          %s456 = smul.addr %s455, 8
          %s457 = scalar_lea.vmem [#allocation12], %s456
          %459 = vsyncadd %s454, 0
          %s460 = smul.addr %s29, 8
          %s461 = scalar_lea.hbm %s2, %s460
          %s463 = sshll.u32 %s461, 4
          %s464 = int_to_ptr.hbm [resolvable:$true] %s463
          %s465 = sshll.u32 %s457, 4
          %s466 = int_to_ptr.vmem [resolvable:$true] %s465
          %468 = dma.hbm_to_vmem [thread:$0]  %s464, 128, %s466, %s454
        $region64: #{tpu_custom_call.1} parent=51 // pred_fallthru
          _
      $region52: #{tpu_custom_call.1} parent=5 // pred_fallthru
        _
      %p469 = scmp.le.s32.totalorder 1, %s29
      %p470 = scmp.lt.s32.totalorder %s29, 3
      %p471 = pnand %p469, %p470
      %p472 = pneg %p471
      // Predicated region
      $region65: #{tpu_custom_call.1} parent=5 // pred_check
        _
      $region66: #{tpu_custom_call.1} parent=5 // pred_check_branch
        %474 = sbr.rel (%p471) target = $region68
      $region67: #{tpu_custom_call.1} parent=5 // pred_region
        %s475 = ssub.s32 %s29, 1
        %s476 = sand.u32 %s42, 1
        %s477 = scalar_lea.sflag [#allocation8], %s476
        %s478 = sand.u32 %s42, 1
        %s479 = smul.addr %s478, 8
        %s480 = scalar_lea.vmem [#allocation7], %s479
        // Predicated region
        $region69: #{tpu_custom_call.1} parent=67 // pred_check
          %p481 = pneg %p55
        $region70: #{tpu_custom_call.1} parent=67 // pred_check_branch
          %483 = sbr.rel (%p481) target = $region72
        $region71: #{tpu_custom_call.1} parent=67 // pred_region
          %485 = dma.done %s477, 128
        $region72: #{tpu_custom_call.1} parent=67 // pred_fallthru
          _
        %s486 = sand.u32 %s34, 1
        %s487 = scalar_lea.sflag [#allocation11], %s486
        %s488 = sand.u32 %s68, 1
        %s489 = smul.addr %s488, 8
        %s490 = scalar_lea.vmem [#allocation10], %s489
        // Predicated region
        $region73: #{tpu_custom_call.1} parent=67 // pred_check
          %p491 = pneg %p81
        $region74: #{tpu_custom_call.1} parent=67 // pred_check_branch
          %493 = sbr.rel (%p491) target = $region76
        $region75: #{tpu_custom_call.1} parent=67 // pred_region
          %495 = dma.done %s487, 128
        $region76: #{tpu_custom_call.1} parent=67 // pred_fallthru
          _
        %s496 = sand.u32 %s34, 1
        %s497 = scalar_lea.sflag [#allocation11], %s496
        %s498 = sand.u32 %s94, 1
        %s499 = smul.addr %s498, 8
        %s500 = scalar_lea.vmem [#allocation12], %s499
        // Predicated region
        $region77: #{tpu_custom_call.1} parent=67 // pred_check
          %p501 = pneg %p107
        $region78: #{tpu_custom_call.1} parent=67 // pred_check_branch
          %503 = sbr.rel (%p501) target = $region80
        $region79: #{tpu_custom_call.1} parent=67 // pred_region
          %505 = dma.done %s497, 128
        $region80: #{tpu_custom_call.1} parent=67 // pred_fallthru
          _
        // Predicated region
        $region81: #{tpu_custom_call.1} parent=67 // pred_check
          %p506 = pneg %p128
        $region82: #{tpu_custom_call.1} parent=67 // pred_check_branch
          %508 = sbr.rel (%p506) target = $region84
        $region83: #{tpu_custom_call.1} parent=67 // pred_region
          %510 = dma.done [#allocation14], 256
        $region84: #{tpu_custom_call.1} parent=67 // pred_fallthru
          _
        // Predicated region
        $region85: #{tpu_custom_call.1} parent=67 // pred_check
          %p511 = pneg %p149
        $region86: #{tpu_custom_call.1} parent=67 // pred_check_branch
          %513 = sbr.rel (%p511) target = $region88
        $region87: #{tpu_custom_call.1} parent=67 // pred_region
          %515 = dma.done [#allocation14], 256
        $region88: #{tpu_custom_call.1} parent=67 // pred_fallthru
          _
        // Predicated region
        $region89: #{tpu_custom_call.1} parent=67 // pred_check
          %p516 = pneg %p170
        $region90: #{tpu_custom_call.1} parent=67 // pred_check_branch
          %518 = sbr.rel (%p516) target = $region92
        $region91: #{tpu_custom_call.1} parent=67 // pred_region
          %520 = dma.done [#allocation17], 256
        $region92: #{tpu_custom_call.1} parent=67 // pred_fallthru
          _
        // Predicated region
        $region93: #{tpu_custom_call.1} parent=67 // pred_check
          %p521 = pneg %p191
        $region94: #{tpu_custom_call.1} parent=67 // pred_check_branch
          %523 = sbr.rel (%p521) target = $region96
        $region95: #{tpu_custom_call.1} parent=67 // pred_region
          %525 = dma.done [#allocation17], 256
        $region96: #{tpu_custom_call.1} parent=67 // pred_fallthru
          _
        %s526 = sand.u32 %s42, 1
        %s527 = scalar_lea.sflag [#allocation8], %s526
        %s528 = sand.u32 %s42, 1
        %s529 = smul.addr %s528, 8
        %s530 = scalar_lea.vmem [#allocation7], %s529
        %p531 = pneg %p55
        %p532 = pneg %p52
        %s533 = sand.u32 %s34, 1
        %s534 = scalar_lea.sflag [#allocation11], %s533
        %s535 = sand.u32 %s68, 1
        %s536 = smul.addr %s535, 8
        %s537 = scalar_lea.vmem [#allocation10], %s536
        %p538 = pneg %p81
        %p539 = pneg %p78
        %s540 = sand.u32 %s34, 1
        %s541 = scalar_lea.sflag [#allocation11], %s540
        %s542 = sand.u32 %s94, 1
        %s543 = smul.addr %s542, 8
        %s544 = scalar_lea.vmem [#allocation12], %s543
        %p545 = pneg %p107
        %p546 = pneg %p104
        %p547 = pneg %p128
        %p548 = pneg %p125
        %p549 = pneg %p149
        %p550 = pneg %p146
        %p551 = pneg %p170
        %p552 = pneg %p167
        %p553 = pneg %p191
        %p554 = pneg %p188
        %p555 = pneg %p212
        %p556 = pneg %p209
        %p557 = pneg %p233
        %p558 = pneg %p230
        %p559 = pneg %p254
        %p560 = pneg %p251
        %p561 = pneg %p275
        %p562 = pneg %p272
        %p563 = pneg %p296
        %p564 = pneg %p293
        %p565 = pneg %p322
        %p566 = pneg %p319
        %s567 = sand.u32 %s309, 1
        %s568 = scalar_lea.sflag [#allocation9], %s567
        %s569 = sand.u32 %s309, 1
        %s570 = smul.addr %s569, 8
        %s571 = scalar_lea.vmem [#allocation19], %s570
        %v573 = vld [vmem:[#allocation13] sm:$0xf]
        %v574 = vld [vmem:[#allocation13 + $0x4] sm:$0xf]
        %v575 = vld [vmem:[#allocation13 + $0x8] sm:$0xf]
        %v576 = vld [vmem:[#allocation13 + $0xc] sm:$0xf]
        %v577 = vld [vmem:[#allocation15] sm:$0xf]
        %v578 = vld [vmem:[#allocation15 + $0x4] sm:$0xf]
        %v579 = vld [vmem:[#allocation15 + $0x8] sm:$0xf]
        %v580 = vld [vmem:[#allocation15 + $0xc] sm:$0xf]
        %v581 = vld [vmem:[#allocation16] sm:$0xf]
        %v582 = vld [vmem:[#allocation16 + $0x4] sm:$0xf]
        %v583 = vld [vmem:[#allocation16 + $0x8] sm:$0xf]
        %v584 = vld [vmem:[#allocation16 + $0xc] sm:$0xf]
        %v585 = vld [vmem:[#allocation18] sm:$0xf]
        %v586 = vld [vmem:[#allocation18 + $0x4] sm:$0xf]
        %v587 = vld [vmem:[#allocation18 + $0x8] sm:$0xf]
        %v588 = vld [vmem:[#allocation18 + $0xc] sm:$0xf]
        %v589 = vld [vmem:[%s480] sm:$0xff]
        %v590 = vpack.c.bf16 %v589, %v589
        %v591 = vld [vmem:[%s7] sm:$0x1]
        %v593 = vperm.slane %v591, 0
        %v599 = vunpack.c.l.b16 %v573
        %v600 = vunpack.c.l.b16 %v574
        %v601 = vunpack.c.l.b16 %v575
        %v602 = vunpack.c.l.b16 %v576
        %v603 = vpack.c.b16 %v600, %v599
        %v604 = vpack.c.b16 %v602, %v601
        %vm607 = vcmask 261120
        %v609 = vsel %vm607, %v590, 0
        %611 = vmatpush.bf16.msra.mxu0 0
        %612 = vmatpush.bf16.msra.mxu0 0
        %613 = vmatpush.bf16.msra.mxu0 0
        %614 = vmatpush.bf16.msra.mxu0 0
        %615 = vmatpush.bf16.msra.mxu0 0
        %616 = vmatpush.bf16.msra.mxu0 0
        %617 = vmatpush.bf16.msra.mxu0 %v604
        %618 = vmatpush.bf16.msra.mxu0 %v603
        %619 = vmatmul.bf16.gmra.mxu0 %v609
        %v620 = vpop.f32.mrf.mxu0
        %v621 = vadd.f32 %v593, %v620
        %v622 = vpop.f32.mrf.mxu0
        %623 = vdwg.mxu0
        %v624 = vld [vmem:[%s490] sm:$0xff]
        %v625 = vpack.c.bf16 %v624, %v624
        %v626 = vld [vmem:[%s8] sm:$0x1]
        %v628 = vperm.slane %v626, 0
        %v634 = vunpack.c.l.b16 %v577
        %v635 = vunpack.c.l.b16 %v578
        %v636 = vunpack.c.l.b16 %v579
        %v637 = vunpack.c.l.b16 %v580
        %v638 = vpack.c.b16 %v635, %v634
        %v639 = vpack.c.b16 %v637, %v636
        %v643 = vsel %vm607, %v625, 0
        %645 = vmatpush.bf16.msra.mxu0 0
        %646 = vmatpush.bf16.msra.mxu0 0
        %647 = vmatpush.bf16.msra.mxu0 0
        %648 = vmatpush.bf16.msra.mxu0 0
        %649 = vmatpush.bf16.msra.mxu0 0
        %650 = vmatpush.bf16.msra.mxu0 0
        %651 = vmatpush.bf16.msra.mxu0 %v639
        %652 = vmatpush.bf16.msra.mxu0 %v638
        %653 = vmatmul.bf16.gmra.mxu0 %v643
        %v654 = vpop.f32.mrf.mxu0
        %v655 = vadd.f32 %v628, %v654
        %v656 = vpop.f32.mrf.mxu0
        %657 = vdwg.mxu0
        %v658 = vld [vmem:[%s500] sm:$0xff]
        %v659 = vpack.c.bf16 %v658, %v658
        %v660 = vld [vmem:[%s9] sm:$0x1]
        %v662 = vperm.slane %v660, 0
        %v668 = vunpack.c.l.b16 %v581
        %v669 = vunpack.c.l.b16 %v582
        %v670 = vunpack.c.l.b16 %v583
        %v671 = vunpack.c.l.b16 %v584
        %v672 = vpack.c.b16 %v669, %v668
        %v673 = vpack.c.b16 %v671, %v670
        %v677 = vsel %vm607, %v659, 0
        %679 = vmatpush.bf16.msra.mxu0 0
        %680 = vmatpush.bf16.msra.mxu0 0
        %681 = vmatpush.bf16.msra.mxu0 0
        %682 = vmatpush.bf16.msra.mxu0 0
        %683 = vmatpush.bf16.msra.mxu0 0
        %684 = vmatpush.bf16.msra.mxu0 0
        %685 = vmatpush.bf16.msra.mxu0 %v673
        %686 = vmatpush.bf16.msra.mxu0 %v672
        %687 = vmatmul.bf16.gmra.mxu0 %v677
        %v688 = vpop.f32.mrf.mxu0
        %v689 = vadd.f32 %v662, %v688
        %v690 = vpop.f32.mrf.mxu0
        %691 = vdwg.mxu0
        %vm692 = vcmask 64512
        %693 = vst.msk [vmem:[#allocation2] sm:$0xff] %vm692, %v621
        %694 = vst.msk [vmem:[#allocation3] sm:$0xff] %vm692, %v655
        %695 = vst.msk [vmem:[#allocation4] sm:$0xff] %vm692, %v689
        %697 = vrot.lane.b32.xlu0 %v621, 120
        %v698 = vpop.permute.xlu0 %697
        %s700 = scalar_lea.vmem [#allocation2], 8
        %701 = vst.msk [vmem:[%s700] sm:$0xff] %vm692, %v698
        %703 = vrot.lane.b32.xlu0 %v655, 120
        %v704 = vpop.permute.xlu0 %703
        %s706 = scalar_lea.vmem [#allocation3], 8
        %707 = vst.msk [vmem:[%s706] sm:$0xff] %vm692, %v704
        %709 = vrot.lane.b32.xlu0 %v689, 120
        %v710 = vpop.permute.xlu0 %709
        %s712 = scalar_lea.vmem [#allocation4], 8
        %713 = vst.msk [vmem:[%s712] sm:$0xff] %vm692, %v710
        %714 = vrot.lane.b32.xlu0 %v621, 112
        %v715 = vpop.permute.xlu0 %714
        %s717 = scalar_lea.vmem [#allocation2], 16
        %718 = vst.msk [vmem:[%s717] sm:$0xff] %vm692, %v715
        %719 = vrot.lane.b32.xlu0 %v655, 112
        %v720 = vpop.permute.xlu0 %719
        %s722 = scalar_lea.vmem [#allocation3], 16
        %723 = vst.msk [vmem:[%s722] sm:$0xff] %vm692, %v720
        %724 = vrot.lane.b32.xlu0 %v689, 112
        %v725 = vpop.permute.xlu0 %724
        %s727 = scalar_lea.vmem [#allocation4], 16
        %728 = vst.msk [vmem:[%s727] sm:$0xff] %vm692, %v725
        %729 = vrot.lane.b32.xlu0 %v621, 104
        %v730 = vpop.permute.xlu0 %729
        %s732 = scalar_lea.vmem [#allocation2], 24
        %733 = vst.msk [vmem:[%s732] sm:$0xff] %vm692, %v730
        %734 = vrot.lane.b32.xlu0 %v655, 104
        %v735 = vpop.permute.xlu0 %734
        %s737 = scalar_lea.vmem [#allocation3], 24
        %738 = vst.msk [vmem:[%s737] sm:$0xff] %vm692, %v735
        %739 = vrot.lane.b32.xlu0 %v689, 104
        %v740 = vpop.permute.xlu0 %739
        %s742 = scalar_lea.vmem [#allocation4], 24
        %743 = vst.msk [vmem:[%s742] sm:$0xff] %vm692, %v740
        %v744 = vld [vmem:[#allocation2] sm:$0xff]
        %v745 = vld [vmem:[#allocation2 + $0x8] sm:$0xff]
        %v746 = vld [vmem:[#allocation2 + $0x10] sm:$0xff]
        %v747 = vld [vmem:[#allocation2 + $0x18] sm:$0xff]
        %v748 = vpack.c.bf16 %v744, %v744
        %v749 = vpack.c.bf16 %v745, %v745
        %v750 = vpack.c.bf16 %v746, %v746
        %v751 = vpack.c.bf16 %v747, %v747
        %v752 = vld [vmem:[#allocation3] sm:$0xff]
        %v753 = vld [vmem:[#allocation3 + $0x8] sm:$0xff]
        %v754 = vld [vmem:[#allocation3 + $0x10] sm:$0xff]
        %v755 = vld [vmem:[#allocation3 + $0x18] sm:$0xff]
        %v756 = vld [vmem:[#allocation4] sm:$0xff]
        %v757 = vld [vmem:[#allocation4 + $0x8] sm:$0xff]
        %v758 = vld [vmem:[#allocation4 + $0x10] sm:$0xff]
        %v759 = vld [vmem:[#allocation4 + $0x18] sm:$0xff]
        %v760 = vpack.c.bf16 %v752, %v752
        %v761 = vpack.c.bf16 %v753, %v753
        %v762 = vpack.c.bf16 %v754, %v754
        %v763 = vpack.c.bf16 %v755, %v755
        %v764 = vpack.c.bf16 %v756, %v756
        %v765 = vpack.c.bf16 %v757, %v757
        %v766 = vpack.c.bf16 %v758, %v758
        %v767 = vpack.c.bf16 %v759, %v759
        %v769 = vsel %vm692, %v748, 0
        %v772 = vsel %vm692, %v760, 0
        %774 = vmatpush.bf16.xpose.msra.mxu0 0
        %775 = vmatpush.bf16.xpose.msra.mxu0 0
        %776 = vmatpush.bf16.xpose.msra.mxu0 0
        %777 = vmatpush.bf16.xpose.msra.mxu0 0
        %778 = vmatpush.bf16.xpose.msra.mxu0 0
        %779 = vmatpush.bf16.xpose.msra.mxu0 0
        %780 = vmatpush.bf16.xpose.msra.mxu0 0
        %781 = vmatpush.bf16.xpose.msra.mxu0 %v772
        %782 = vmatmul.bf16.gmra.mxu0 %v769
        %v783 = vpop.f32.mrf.mxu0
        %v784 = vadd.f32 0.0, %v783
        %v785 = vpop.f32.mrf.mxu0
        %786 = vdwg.mxu0
        %v788 = vsel %vm692, %v749, 0
        %v791 = vsel %vm692, %v761, 0
        %793 = vmatpush.bf16.xpose.msra.mxu0 0
        %794 = vmatpush.bf16.xpose.msra.mxu0 0
        %795 = vmatpush.bf16.xpose.msra.mxu0 0
        %796 = vmatpush.bf16.xpose.msra.mxu0 0
        %797 = vmatpush.bf16.xpose.msra.mxu0 0
        %798 = vmatpush.bf16.xpose.msra.mxu0 0
        %799 = vmatpush.bf16.xpose.msra.mxu0 0
        %800 = vmatpush.bf16.xpose.msra.mxu0 %v791
        %801 = vmatmul.bf16.gmra.mxu0 %v788
        %v802 = vpop.f32.mrf.mxu0
        %v803 = vadd.f32 0.0, %v802
        %v804 = vpop.f32.mrf.mxu0
        %805 = vdwg.mxu0
        %v807 = vsel %vm692, %v750, 0
        %v810 = vsel %vm692, %v762, 0
        %812 = vmatpush.bf16.xpose.msra.mxu0 0
        %813 = vmatpush.bf16.xpose.msra.mxu0 0
        %814 = vmatpush.bf16.xpose.msra.mxu0 0
        %815 = vmatpush.bf16.xpose.msra.mxu0 0
        %816 = vmatpush.bf16.xpose.msra.mxu0 0
        %817 = vmatpush.bf16.xpose.msra.mxu0 0
        %818 = vmatpush.bf16.xpose.msra.mxu0 0
        %819 = vmatpush.bf16.xpose.msra.mxu0 %v810
        %820 = vmatmul.bf16.gmra.mxu0 %v807
        %v821 = vpop.f32.mrf.mxu0
        %v822 = vadd.f32 0.0, %v821
        %v823 = vpop.f32.mrf.mxu0
        %824 = vdwg.mxu0
        %v826 = vsel %vm692, %v751, 0
        %v829 = vsel %vm692, %v763, 0
        %831 = vmatpush.bf16.xpose.msra.mxu0 0
        %832 = vmatpush.bf16.xpose.msra.mxu0 0
        %833 = vmatpush.bf16.xpose.msra.mxu0 0
        %834 = vmatpush.bf16.xpose.msra.mxu0 0
        %835 = vmatpush.bf16.xpose.msra.mxu0 0
        %836 = vmatpush.bf16.xpose.msra.mxu0 0
        %837 = vmatpush.bf16.xpose.msra.mxu0 0
        %838 = vmatpush.bf16.xpose.msra.mxu0 %v829
        %839 = vmatmul.bf16.gmra.mxu0 %v826
        %v840 = vpop.f32.mrf.mxu0
        %v841 = vadd.f32 0.0, %v840
        %v842 = vpop.f32.mrf.mxu0
        %843 = vdwg.mxu0
        %v844 = vsel %vm692, %v784, -inf
        %845 = vmax.xlane.f32.xlu0 %v844
        %v846 = vpop.xlane.xlu0 %845
        %v847 = vsel %vm692, %v803, -inf
        %848 = vmax.xlane.f32.xlu0 %v847
        %v849 = vpop.xlane.xlu0 %848
        %v850 = vsel %vm692, %v822, -inf
        %851 = vmax.xlane.f32.xlu0 %v850
        %v852 = vpop.xlane.xlu0 %851
        %v853 = vsel %vm692, %v841, -inf
        %854 = vmax.xlane.f32.xlu0 %v853
        %v855 = vpop.xlane.xlu0 %854
        %v856 = vsub.f32 %v784, %v846
        %v857 = vsub.f32 %v803, %v849
        %v858 = vsub.f32 %v822, %v852
        %v859 = vsub.f32 %v841, %v855
        %v860 = vmul.f32 %v856, 1.442695
        %v861 = vpow.pop %v860
        %v862 = vmul.f32 %v857, 1.442695
        %v863 = vpow.pop %v862
        %v864 = vmul.f32 %v858, 1.442695
        %v865 = vpow.pop %v864
        %v866 = vmul.f32 %v859, 1.442695
        %v867 = vpow.pop %v866
        %v868 = vsel %vm692, %v861, 0.0
        %869 = vadd.xlane.f32.xlu0 %v868
        %v870 = vpop.xlane.xlu0 %869
        %v871 = vsel %vm692, %v863, 0.0
        %872 = vadd.xlane.f32.xlu0 %v871
        %v873 = vpop.xlane.xlu0 %872
        %v874 = vsel %vm692, %v865, 0.0
        %875 = vadd.xlane.f32.xlu0 %v874
        %v876 = vpop.xlane.xlu0 %875
        %v877 = vsel %vm692, %v867, 0.0
        %878 = vadd.xlane.f32.xlu0 %v877
        %v879 = vpop.xlane.xlu0 %878
        %v880 = vpack.c.bf16 %v861, %v861
        %v881 = vpack.c.bf16 %v863, %v863
        %v882 = vpack.c.bf16 %v865, %v865
        %v883 = vpack.c.bf16 %v867, %v867
        %v885 = vsel %vm692, %v880, 0
        %vm887 = vcmask 1043456
        %v889 = vsel %vm887, %v764, 0
        %891 = vmatpush.bf16.msra.mxu0 0
        %892 = vmatpush.bf16.msra.mxu0 0
        %893 = vmatpush.bf16.msra.mxu0 0
        %894 = vmatpush.bf16.msra.mxu0 0
        %895 = vmatpush.bf16.msra.mxu0 0
        %896 = vmatpush.bf16.msra.mxu0 0
        %897 = vmatpush.bf16.msra.mxu0 0
        %898 = vmatpush.bf16.msra.mxu0 %v889
        %899 = vmatmul.bf16.gmra.mxu0 %v885
        %v900 = vpop.f32.mrf.mxu0
        %v901 = vadd.f32 0.0, %v900
        %v902 = vpop.f32.mrf.mxu0
        %903 = vdwg.mxu0
        %v905 = vsel %vm692, %v881, 0
        %v908 = vsel %vm887, %v765, 0
        %910 = vmatpush.bf16.msra.mxu0 0
        %911 = vmatpush.bf16.msra.mxu0 0
        %912 = vmatpush.bf16.msra.mxu0 0
        %913 = vmatpush.bf16.msra.mxu0 0
        %914 = vmatpush.bf16.msra.mxu0 0
        %915 = vmatpush.bf16.msra.mxu0 0
        %916 = vmatpush.bf16.msra.mxu0 0
        %917 = vmatpush.bf16.msra.mxu0 %v908
        %918 = vmatmul.bf16.gmra.mxu0 %v905
        %v919 = vpop.f32.mrf.mxu0
        %v920 = vadd.f32 0.0, %v919
        %v921 = vpop.f32.mrf.mxu0
        %922 = vdwg.mxu0
        %v924 = vsel %vm692, %v882, 0
        %v927 = vsel %vm887, %v766, 0
        %929 = vmatpush.bf16.msra.mxu0 0
        %930 = vmatpush.bf16.msra.mxu0 0
        %931 = vmatpush.bf16.msra.mxu0 0
        %932 = vmatpush.bf16.msra.mxu0 0
        %933 = vmatpush.bf16.msra.mxu0 0
        %934 = vmatpush.bf16.msra.mxu0 0
        %935 = vmatpush.bf16.msra.mxu0 0
        %936 = vmatpush.bf16.msra.mxu0 %v927
        %937 = vmatmul.bf16.gmra.mxu0 %v924
        %v938 = vpop.f32.mrf.mxu0
        %v939 = vadd.f32 0.0, %v938
        %v940 = vpop.f32.mrf.mxu0
        %941 = vdwg.mxu0
        %v943 = vsel %vm692, %v883, 0
        %v946 = vsel %vm887, %v767, 0
        %948 = vmatpush.bf16.msra.mxu0 0
        %949 = vmatpush.bf16.msra.mxu0 0
        %950 = vmatpush.bf16.msra.mxu0 0
        %951 = vmatpush.bf16.msra.mxu0 0
        %952 = vmatpush.bf16.msra.mxu0 0
        %953 = vmatpush.bf16.msra.mxu0 0
        %954 = vmatpush.bf16.msra.mxu0 0
        %955 = vmatpush.bf16.msra.mxu0 %v946
        %956 = vmatmul.bf16.gmra.mxu0 %v943
        %v957 = vpop.f32.mrf.mxu0
        %v958 = vadd.f32 0.0, %v957
        %v959 = vpop.f32.mrf.mxu0
        %960 = vdwg.mxu0
        %v961 = vrcp.pop %v870
        %v962 = vrcp.pop %v873
        %v963 = vrcp.pop %v876
        %v964 = vrcp.pop %v879
        %v965 = vmul.f32 %v901, %v961
        %v966 = vmul.f32 %v920, %v962
        %v967 = vmul.f32 %v939, %v963
        %v968 = vmul.f32 %v958, %v964
        %v969 = vld [vmem:[#allocation3] ss:$2 sm:$0xf]
        %s970 = scalar_lea.vmem [#allocation3], 8
        %v971 = vld [vmem:[%s970] ss:$2 sm:$0xf]
        %s972 = scalar_lea.vmem [#allocation3], 16
        %v973 = vld [vmem:[%s972] ss:$2 sm:$0xf]
        %s974 = scalar_lea.vmem [#allocation3], 24
        %v975 = vld [vmem:[%s974] ss:$2 sm:$0xf]
        %v976 = vld [vmem:[#allocation4] ss:$2 sm:$0xf]
        %s977 = scalar_lea.vmem [#allocation4], 8
        %v978 = vld [vmem:[%s977] ss:$2 sm:$0xf]
        %s979 = scalar_lea.vmem [#allocation4], 16
        %v980 = vld [vmem:[%s979] ss:$2 sm:$0xf]
        %s981 = scalar_lea.vmem [#allocation4], 24
        %v982 = vld [vmem:[%s981] ss:$2 sm:$0xf]
        %s983 = scalar_lea.vmem [#allocation3], 1
        %v984 = vld [vmem:[%s983] ss:$2 sm:$0xf]
        %s985 = scalar_lea.vmem [#allocation3], 9
        %v986 = vld [vmem:[%s985] ss:$2 sm:$0xf]
        %s987 = scalar_lea.vmem [#allocation3], 17
        %v988 = vld [vmem:[%s987] ss:$2 sm:$0xf]
        %s989 = scalar_lea.vmem [#allocation3], 25
        %v990 = vld [vmem:[%s989] ss:$2 sm:$0xf]
        %v991 = vadd.f32 %v969, %v984
        %v992 = vadd.f32 %v971, %v986
        %v993 = vadd.f32 %v973, %v988
        %v994 = vadd.f32 %v975, %v990
        %s995 = scalar_lea.vmem [#allocation4], 1
        %v996 = vld [vmem:[%s995] ss:$2 sm:$0xf]
        %s997 = scalar_lea.vmem [#allocation4], 9
        %v998 = vld [vmem:[%s997] ss:$2 sm:$0xf]
        %s999 = scalar_lea.vmem [#allocation4], 17
        %v1000 = vld [vmem:[%s999] ss:$2 sm:$0xf]
        %s1001 = scalar_lea.vmem [#allocation4], 25
        %v1002 = vld [vmem:[%s1001] ss:$2 sm:$0xf]
        %v1003 = vadd.f32 %v976, %v996
        %v1004 = vadd.f32 %v978, %v998
        %v1005 = vadd.f32 %v980, %v1000
        %v1006 = vadd.f32 %v982, %v1002
        %v1007 = vmul.f32 %v991, 0.5
        %v1008 = vmul.f32 %v992, 0.5
        %v1009 = vmul.f32 %v993, 0.5
        %v1010 = vmul.f32 %v994, 0.5
        %v1011 = vmul.f32 %v1003, 0.5
        %v1012 = vmul.f32 %v1004, 0.5
        %v1013 = vmul.f32 %v1005, 0.5
        %v1014 = vmul.f32 %v1006, 0.5
        %v1015 = vpack.c.bf16 %v1007, %v1007
        %v1016 = vpack.c.bf16 %v1008, %v1008
        %v1017 = vpack.c.bf16 %v1009, %v1009
        %v1018 = vpack.c.bf16 %v1010, %v1010
        %v1019 = vpack.c.bf16 %v1011, %v1011
        %v1020 = vpack.c.bf16 %v1012, %v1012
        %v1021 = vpack.c.bf16 %v1013, %v1013
        %v1022 = vpack.c.bf16 %v1014, %v1014
        %v1024 = vsel %vm692, %v1015, 0
        %1026 = vmatpush.bf16.xpose.msra.mxu0 0
        %1027 = vmatpush.bf16.xpose.msra.mxu0 0
        %1028 = vmatpush.bf16.xpose.msra.mxu0 0
        %1029 = vmatpush.bf16.xpose.msra.mxu0 0
        %1030 = vmatpush.bf16.xpose.msra.mxu0 0
        %1031 = vmatpush.bf16.xpose.msra.mxu0 0
        %1032 = vmatpush.bf16.xpose.msra.mxu0 0
        %1033 = vmatpush.bf16.xpose.msra.mxu0 %v1024
        %1034 = vmatmul.bf16.gmra.mxu0 %v769
        %v1035 = vpop.f32.mrf.mxu0
        %v1036 = vadd.f32 0.0, %v1035
        %v1037 = vpop.f32.mrf.mxu0
        %1038 = vdwg.mxu0
        %v1040 = vsel %vm692, %v1016, 0
        %1042 = vmatpush.bf16.xpose.msra.mxu0 0
        %1043 = vmatpush.bf16.xpose.msra.mxu0 0
        %1044 = vmatpush.bf16.xpose.msra.mxu0 0
        %1045 = vmatpush.bf16.xpose.msra.mxu0 0
        %1046 = vmatpush.bf16.xpose.msra.mxu0 0
        %1047 = vmatpush.bf16.xpose.msra.mxu0 0
        %1048 = vmatpush.bf16.xpose.msra.mxu0 0
        %1049 = vmatpush.bf16.xpose.msra.mxu0 %v1040
        %1050 = vmatmul.bf16.gmra.mxu0 %v788
        %v1051 = vpop.f32.mrf.mxu0
        %v1052 = vadd.f32 0.0, %v1051
        %v1053 = vpop.f32.mrf.mxu0
        %1054 = vdwg.mxu0
        %v1056 = vsel %vm692, %v1017, 0
        %1058 = vmatpush.bf16.xpose.msra.mxu0 0
        %1059 = vmatpush.bf16.xpose.msra.mxu0 0
        %1060 = vmatpush.bf16.xpose.msra.mxu0 0
        %1061 = vmatpush.bf16.xpose.msra.mxu0 0
        %1062 = vmatpush.bf16.xpose.msra.mxu0 0
        %1063 = vmatpush.bf16.xpose.msra.mxu0 0
        %1064 = vmatpush.bf16.xpose.msra.mxu0 0
        %1065 = vmatpush.bf16.xpose.msra.mxu0 %v1056
        %1066 = vmatmul.bf16.gmra.mxu0 %v807
        %v1067 = vpop.f32.mrf.mxu0
        %v1068 = vadd.f32 0.0, %v1067
        %v1069 = vpop.f32.mrf.mxu0
        %1070 = vdwg.mxu0
        %v1072 = vsel %vm692, %v1018, 0
        %1074 = vmatpush.bf16.xpose.msra.mxu0 0
        %1075 = vmatpush.bf16.xpose.msra.mxu0 0
        %1076 = vmatpush.bf16.xpose.msra.mxu0 0
        %1077 = vmatpush.bf16.xpose.msra.mxu0 0
        %1078 = vmatpush.bf16.xpose.msra.mxu0 0
        %1079 = vmatpush.bf16.xpose.msra.mxu0 0
        %1080 = vmatpush.bf16.xpose.msra.mxu0 0
        %1081 = vmatpush.bf16.xpose.msra.mxu0 %v1072
        %1082 = vmatmul.bf16.gmra.mxu0 %v826
        %v1083 = vpop.f32.mrf.mxu0
        %v1084 = vadd.f32 0.0, %v1083
        %v1085 = vpop.f32.mrf.mxu0
        %1086 = vdwg.mxu0
        %vm1087 = vcmask 31744
        %v1088 = vsel %vm1087, %v1036, -inf
        %1089 = vmax.xlane.f32.xlu0 %v1088
        %v1090 = vpop.xlane.xlu0 %1089
        %v1091 = vsel %vm1087, %v1052, -inf
        %1092 = vmax.xlane.f32.xlu0 %v1091
        %v1093 = vpop.xlane.xlu0 %1092
        %v1094 = vsel %vm1087, %v1068, -inf
        %1095 = vmax.xlane.f32.xlu0 %v1094
        %v1096 = vpop.xlane.xlu0 %1095
        %v1097 = vsel %vm1087, %v1084, -inf
        %1098 = vmax.xlane.f32.xlu0 %v1097
        %v1099 = vpop.xlane.xlu0 %1098
        %v1100 = vsub.f32 %v1036, %v1090
        %v1101 = vsub.f32 %v1052, %v1093
        %v1102 = vsub.f32 %v1068, %v1096
        %v1103 = vsub.f32 %v1084, %v1099
        %v1104 = vmul.f32 %v1100, 1.442695
        %v1105 = vpow.pop %v1104
        %v1106 = vmul.f32 %v1101, 1.442695
        %v1107 = vpow.pop %v1106
        %v1108 = vmul.f32 %v1102, 1.442695
        %v1109 = vpow.pop %v1108
        %v1110 = vmul.f32 %v1103, 1.442695
        %v1111 = vpow.pop %v1110
        %v1112 = vsel %vm1087, %v1105, 0.0
        %1113 = vadd.xlane.f32.xlu0 %v1112
        %v1114 = vpop.xlane.xlu0 %1113
        %v1115 = vsel %vm1087, %v1107, 0.0
        %1116 = vadd.xlane.f32.xlu0 %v1115
        %v1117 = vpop.xlane.xlu0 %1116
        %v1118 = vsel %vm1087, %v1109, 0.0
        %1119 = vadd.xlane.f32.xlu0 %v1118
        %v1120 = vpop.xlane.xlu0 %1119
        %v1121 = vsel %vm1087, %v1111, 0.0
        %1122 = vadd.xlane.f32.xlu0 %v1121
        %v1123 = vpop.xlane.xlu0 %1122
        %v1124 = vpack.c.bf16 %v1105, %v1105
        %v1125 = vpack.c.bf16 %v1107, %v1107
        %v1126 = vpack.c.bf16 %v1109, %v1109
        %v1127 = vpack.c.bf16 %v1111, %v1111
        %v1129 = vsel %vm1087, %v1124, 0
        %vm1131 = vcmask 1041408
        %v1133 = vsel %vm1131, %v1019, 0
        %1135 = vmatpush.bf16.msra.mxu0 0
        %1136 = vmatpush.bf16.msra.mxu0 0
        %1137 = vmatpush.bf16.msra.mxu0 0
        %1138 = vmatpush.bf16.msra.mxu0 0
        %1139 = vmatpush.bf16.msra.mxu0 0
        %1140 = vmatpush.bf16.msra.mxu0 0
        %1141 = vmatpush.bf16.msra.mxu0 0
        %1142 = vmatpush.bf16.msra.mxu0 %v1133
        %1143 = vmatmul.bf16.gmra.mxu0 %v1129
        %v1144 = vpop.f32.mrf.mxu0
        %v1145 = vadd.f32 0.0, %v1144
        %v1146 = vpop.f32.mrf.mxu0
        %1147 = vdwg.mxu0
        %v1149 = vsel %vm1087, %v1125, 0
        %v1152 = vsel %vm1131, %v1020, 0
        %1154 = vmatpush.bf16.msra.mxu0 0
        %1155 = vmatpush.bf16.msra.mxu0 0
        %1156 = vmatpush.bf16.msra.mxu0 0
        %1157 = vmatpush.bf16.msra.mxu0 0
        %1158 = vmatpush.bf16.msra.mxu0 0
        %1159 = vmatpush.bf16.msra.mxu0 0
        %1160 = vmatpush.bf16.msra.mxu0 0
        %1161 = vmatpush.bf16.msra.mxu0 %v1152
        %1162 = vmatmul.bf16.gmra.mxu0 %v1149
        %v1163 = vpop.f32.mrf.mxu0
        %v1164 = vadd.f32 0.0, %v1163
        %v1165 = vpop.f32.mrf.mxu0
        %1166 = vdwg.mxu0
        %v1168 = vsel %vm1087, %v1126, 0
        %v1171 = vsel %vm1131, %v1021, 0
        %1173 = vmatpush.bf16.msra.mxu0 0
        %1174 = vmatpush.bf16.msra.mxu0 0
        %1175 = vmatpush.bf16.msra.mxu0 0
        %1176 = vmatpush.bf16.msra.mxu0 0
        %1177 = vmatpush.bf16.msra.mxu0 0
        %1178 = vmatpush.bf16.msra.mxu0 0
        %1179 = vmatpush.bf16.msra.mxu0 0
        %1180 = vmatpush.bf16.msra.mxu0 %v1171
        %1181 = vmatmul.bf16.gmra.mxu0 %v1168
        %v1182 = vpop.f32.mrf.mxu0
        %v1183 = vadd.f32 0.0, %v1182
        %v1184 = vpop.f32.mrf.mxu0
        %1185 = vdwg.mxu0
        %v1187 = vsel %vm1087, %v1127, 0
        %v1190 = vsel %vm1131, %v1022, 0
        %1192 = vmatpush.bf16.msra.mxu0 0
        %1193 = vmatpush.bf16.msra.mxu0 0
        %1194 = vmatpush.bf16.msra.mxu0 0
        %1195 = vmatpush.bf16.msra.mxu0 0
        %1196 = vmatpush.bf16.msra.mxu0 0
        %1197 = vmatpush.bf16.msra.mxu0 0
        %1198 = vmatpush.bf16.msra.mxu0 0
        %1199 = vmatpush.bf16.msra.mxu0 %v1190
        %1200 = vmatmul.bf16.gmra.mxu0 %v1187
        %v1201 = vpop.f32.mrf.mxu0
        %v1202 = vadd.f32 0.0, %v1201
        %v1203 = vpop.f32.mrf.mxu0
        %1204 = vdwg.mxu0
        %v1205 = vrcp.pop %v1114
        %v1206 = vrcp.pop %v1117
        %v1207 = vrcp.pop %v1120
        %v1208 = vrcp.pop %v1123
        %v1209 = vmul.f32 %v1145, %v1205
        %v1210 = vmul.f32 %v1164, %v1206
        %v1211 = vmul.f32 %v1183, %v1207
        %v1212 = vmul.f32 %v1202, %v1208
        %v1213 = vadd.f32 %v965, %v1209
        %v1214 = vadd.f32 %v966, %v1210
        %v1215 = vadd.f32 %v967, %v1211
        %v1216 = vadd.f32 %v968, %v1212
        %v1217 = vld [vmem:[#allocation3] ss:$4 sm:$0x3]
        %v1218 = vld [vmem:[%s970] ss:$4 sm:$0x3]
        %v1219 = vld [vmem:[%s972] ss:$4 sm:$0x3]
        %v1220 = vld [vmem:[%s974] ss:$4 sm:$0x3]
        %v1221 = vld [vmem:[#allocation4] ss:$4 sm:$0x3]
        %v1222 = vld [vmem:[%s977] ss:$4 sm:$0x3]
        %v1223 = vld [vmem:[%s979] ss:$4 sm:$0x3]
        %v1224 = vld [vmem:[%s981] ss:$4 sm:$0x3]
        %v1225 = vld [vmem:[%s983] ss:$4 sm:$0x3]
        %v1226 = vld [vmem:[%s985] ss:$4 sm:$0x3]
        %v1227 = vld [vmem:[%s987] ss:$4 sm:$0x3]
        %v1228 = vld [vmem:[%s989] ss:$4 sm:$0x3]
        %v1229 = vadd.f32 %v1217, %v1225
        %v1230 = vadd.f32 %v1218, %v1226
        %v1231 = vadd.f32 %v1219, %v1227
        %v1232 = vadd.f32 %v1220, %v1228
        %v1233 = vld [vmem:[%s995] ss:$4 sm:$0x3]
        %v1234 = vld [vmem:[%s997] ss:$4 sm:$0x3]
        %v1235 = vld [vmem:[%s999] ss:$4 sm:$0x3]
        %v1236 = vld [vmem:[%s1001] ss:$4 sm:$0x3]
        %v1237 = vadd.f32 %v1221, %v1233
        %v1238 = vadd.f32 %v1222, %v1234
        %v1239 = vadd.f32 %v1223, %v1235
        %v1240 = vadd.f32 %v1224, %v1236
        %s1241 = scalar_lea.vmem [#allocation3], 2
        %v1242 = vld [vmem:[%s1241] ss:$4 sm:$0x3]
        %s1243 = scalar_lea.vmem [#allocation3], 10
        %v1244 = vld [vmem:[%s1243] ss:$4 sm:$0x3]
        %s1245 = scalar_lea.vmem [#allocation3], 18
        %v1246 = vld [vmem:[%s1245] ss:$4 sm:$0x3]
        %s1247 = scalar_lea.vmem [#allocation3], 26
        %v1248 = vld [vmem:[%s1247] ss:$4 sm:$0x3]
        %v1249 = vadd.f32 %v1229, %v1242
        %v1250 = vadd.f32 %v1230, %v1244
        %v1251 = vadd.f32 %v1231, %v1246
        %v1252 = vadd.f32 %v1232, %v1248
        %s1253 = scalar_lea.vmem [#allocation4], 2
        %v1254 = vld [vmem:[%s1253] ss:$4 sm:$0x3]
        %s1255 = scalar_lea.vmem [#allocation4], 10
        %v1256 = vld [vmem:[%s1255] ss:$4 sm:$0x3]
        %s1257 = scalar_lea.vmem [#allocation4], 18
        %v1258 = vld [vmem:[%s1257] ss:$4 sm:$0x3]
        %s1259 = scalar_lea.vmem [#allocation4], 26
        %v1260 = vld [vmem:[%s1259] ss:$4 sm:$0x3]
        %v1261 = vadd.f32 %v1237, %v1254
        %v1262 = vadd.f32 %v1238, %v1256
        %v1263 = vadd.f32 %v1239, %v1258
        %v1264 = vadd.f32 %v1240, %v1260
        %s1265 = scalar_lea.vmem [#allocation3], 3
        %v1266 = vld [vmem:[%s1265] ss:$4 sm:$0x3]
        %s1267 = scalar_lea.vmem [#allocation3], 11
        %v1268 = vld [vmem:[%s1267] ss:$4 sm:$0x3]
        %s1269 = scalar_lea.vmem [#allocation3], 19
        %v1270 = vld [vmem:[%s1269] ss:$4 sm:$0x3]
        %s1271 = scalar_lea.vmem [#allocation3], 27
        %v1272 = vld [vmem:[%s1271] ss:$4 sm:$0x3]
        %v1273 = vadd.f32 %v1249, %v1266
        %v1274 = vadd.f32 %v1250, %v1268
        %v1275 = vadd.f32 %v1251, %v1270
        %v1276 = vadd.f32 %v1252, %v1272
        %s1277 = scalar_lea.vmem [#allocation4], 3
        %v1278 = vld [vmem:[%s1277] ss:$4 sm:$0x3]
        %s1279 = scalar_lea.vmem [#allocation4], 11
        %v1280 = vld [vmem:[%s1279] ss:$4 sm:$0x3]
        %s1281 = scalar_lea.vmem [#allocation4], 19
        %v1282 = vld [vmem:[%s1281] ss:$4 sm:$0x3]
        %s1283 = scalar_lea.vmem [#allocation4], 27
        %v1284 = vld [vmem:[%s1283] ss:$4 sm:$0x3]
        %v1285 = vadd.f32 %v1261, %v1278
        %v1286 = vadd.f32 %v1262, %v1280
        %v1287 = vadd.f32 %v1263, %v1282
        %v1288 = vadd.f32 %v1264, %v1284
        %v1289 = vmul.f32 %v1273, 0.25
        %v1290 = vmul.f32 %v1274, 0.25
        %v1291 = vmul.f32 %v1275, 0.25
        %v1292 = vmul.f32 %v1276, 0.25
        %v1293 = vmul.f32 %v1285, 0.25
        %v1294 = vmul.f32 %v1286, 0.25
        %v1295 = vmul.f32 %v1287, 0.25
        %v1296 = vmul.f32 %v1288, 0.25
        %v1297 = vpack.c.bf16 %v1289, %v1289
        %v1298 = vpack.c.bf16 %v1290, %v1290
        %v1299 = vpack.c.bf16 %v1291, %v1291
        %v1300 = vpack.c.bf16 %v1292, %v1292
        %v1301 = vpack.c.bf16 %v1293, %v1293
        %v1302 = vpack.c.bf16 %v1294, %v1294
        %v1303 = vpack.c.bf16 %v1295, %v1295
        %v1304 = vpack.c.bf16 %v1296, %v1296
        %v1306 = vsel %vm692, %v1297, 0
        %1308 = vmatpush.bf16.xpose.msra.mxu0 0
        %1309 = vmatpush.bf16.xpose.msra.mxu0 0
        %1310 = vmatpush.bf16.xpose.msra.mxu0 0
        %1311 = vmatpush.bf16.xpose.msra.mxu0 0
        %1312 = vmatpush.bf16.xpose.msra.mxu0 0
        %1313 = vmatpush.bf16.xpose.msra.mxu0 0
        %1314 = vmatpush.bf16.xpose.msra.mxu0 0
        %1315 = vmatpush.bf16.xpose.msra.mxu0 %v1306
        %1316 = vmatmul.bf16.gmra.mxu0 %v769
        %v1317 = vpop.f32.mrf.mxu0
        %v1318 = vadd.f32 0.0, %v1317
        %v1319 = vpop.f32.mrf.mxu0
        %1320 = vdwg.mxu0
        %v1322 = vsel %vm692, %v1298, 0
        %1324 = vmatpush.bf16.xpose.msra.mxu0 0
        %1325 = vmatpush.bf16.xpose.msra.mxu0 0
        %1326 = vmatpush.bf16.xpose.msra.mxu0 0
        %1327 = vmatpush.bf16.xpose.msra.mxu0 0
        %1328 = vmatpush.bf16.xpose.msra.mxu0 0
        %1329 = vmatpush.bf16.xpose.msra.mxu0 0
        %1330 = vmatpush.bf16.xpose.msra.mxu0 0
        %1331 = vmatpush.bf16.xpose.msra.mxu0 %v1322
        %1332 = vmatmul.bf16.gmra.mxu0 %v788
        %v1333 = vpop.f32.mrf.mxu0
        %v1334 = vadd.f32 0.0, %v1333
        %v1335 = vpop.f32.mrf.mxu0
        %1336 = vdwg.mxu0
        %v1338 = vsel %vm692, %v1299, 0
        %1340 = vmatpush.bf16.xpose.msra.mxu0 0
        %1341 = vmatpush.bf16.xpose.msra.mxu0 0
        %1342 = vmatpush.bf16.xpose.msra.mxu0 0
        %1343 = vmatpush.bf16.xpose.msra.mxu0 0
        %1344 = vmatpush.bf16.xpose.msra.mxu0 0
        %1345 = vmatpush.bf16.xpose.msra.mxu0 0
        %1346 = vmatpush.bf16.xpose.msra.mxu0 0
        %1347 = vmatpush.bf16.xpose.msra.mxu0 %v1338
        %1348 = vmatmul.bf16.gmra.mxu0 %v807
        %v1349 = vpop.f32.mrf.mxu0
        %v1350 = vadd.f32 0.0, %v1349
        %v1351 = vpop.f32.mrf.mxu0
        %1352 = vdwg.mxu0
        %v1354 = vsel %vm692, %v1300, 0
        %1356 = vmatpush.bf16.xpose.msra.mxu0 0
        %1357 = vmatpush.bf16.xpose.msra.mxu0 0
        %1358 = vmatpush.bf16.xpose.msra.mxu0 0
        %1359 = vmatpush.bf16.xpose.msra.mxu0 0
        %1360 = vmatpush.bf16.xpose.msra.mxu0 0
        %1361 = vmatpush.bf16.xpose.msra.mxu0 0
        %1362 = vmatpush.bf16.xpose.msra.mxu0 0
        %1363 = vmatpush.bf16.xpose.msra.mxu0 %v1354
        %1364 = vmatmul.bf16.gmra.mxu0 %v826
        %v1365 = vpop.f32.mrf.mxu0
        %v1366 = vadd.f32 0.0, %v1365
        %v1367 = vpop.f32.mrf.mxu0
        %1368 = vdwg.mxu0
        %vm1369 = vcmask 15360
        %v1370 = vsel %vm1369, %v1318, -inf
        %1371 = vmax.xlane.f32.xlu0 %v1370
        %v1372 = vpop.xlane.xlu0 %1371
        %v1373 = vsel %vm1369, %v1334, -inf
        %1374 = vmax.xlane.f32.xlu0 %v1373
        %v1375 = vpop.xlane.xlu0 %1374
        %v1376 = vsel %vm1369, %v1350, -inf
        %1377 = vmax.xlane.f32.xlu0 %v1376
        %v1378 = vpop.xlane.xlu0 %1377
        %v1379 = vsel %vm1369, %v1366, -inf
        %1380 = vmax.xlane.f32.xlu0 %v1379
        %v1381 = vpop.xlane.xlu0 %1380
        %v1382 = vsub.f32 %v1318, %v1372
        %v1383 = vsub.f32 %v1334, %v1375
        %v1384 = vsub.f32 %v1350, %v1378
        %v1385 = vsub.f32 %v1366, %v1381
        %v1386 = vmul.f32 %v1382, 1.442695
        %v1387 = vpow.pop %v1386
        %v1388 = vmul.f32 %v1383, 1.442695
        %v1389 = vpow.pop %v1388
        %v1390 = vmul.f32 %v1384, 1.442695
        %v1391 = vpow.pop %v1390
        %v1392 = vmul.f32 %v1385, 1.442695
        %v1393 = vpow.pop %v1392
        %v1394 = vsel %vm1369, %v1387, 0.0
        %1395 = vadd.xlane.f32.xlu0 %v1394
        %v1396 = vpop.xlane.xlu0 %1395
        %v1397 = vsel %vm1369, %v1389, 0.0
        %1398 = vadd.xlane.f32.xlu0 %v1397
        %v1399 = vpop.xlane.xlu0 %1398
        %v1400 = vsel %vm1369, %v1391, 0.0
        %1401 = vadd.xlane.f32.xlu0 %v1400
        %v1402 = vpop.xlane.xlu0 %1401
        %v1403 = vsel %vm1369, %v1393, 0.0
        %1404 = vadd.xlane.f32.xlu0 %v1403
        %v1405 = vpop.xlane.xlu0 %1404
        %v1406 = vpack.c.bf16 %v1387, %v1387
        %v1407 = vpack.c.bf16 %v1389, %v1389
        %v1408 = vpack.c.bf16 %v1391, %v1391
        %v1409 = vpack.c.bf16 %v1393, %v1393
        %v1411 = vsel %vm1369, %v1406, 0
        %vm1413 = vcmask 1040384
        %v1415 = vsel %vm1413, %v1301, 0
        %1417 = vmatpush.bf16.msra.mxu0 0
        %1418 = vmatpush.bf16.msra.mxu0 0
        %1419 = vmatpush.bf16.msra.mxu0 0
        %1420 = vmatpush.bf16.msra.mxu0 0
        %1421 = vmatpush.bf16.msra.mxu0 0
        %1422 = vmatpush.bf16.msra.mxu0 0
        %1423 = vmatpush.bf16.msra.mxu0 0
        %1424 = vmatpush.bf16.msra.mxu0 %v1415
        %1425 = vmatmul.bf16.gmra.mxu0 %v1411
        %v1426 = vpop.f32.mrf.mxu0
        %v1427 = vadd.f32 0.0, %v1426
        %v1428 = vpop.f32.mrf.mxu0
        %1429 = vdwg.mxu0
        %v1431 = vsel %vm1369, %v1407, 0
        %v1434 = vsel %vm1413, %v1302, 0
        %1436 = vmatpush.bf16.msra.mxu0 0
        %1437 = vmatpush.bf16.msra.mxu0 0
        %1438 = vmatpush.bf16.msra.mxu0 0
        %1439 = vmatpush.bf16.msra.mxu0 0
        %1440 = vmatpush.bf16.msra.mxu0 0
        %1441 = vmatpush.bf16.msra.mxu0 0
        %1442 = vmatpush.bf16.msra.mxu0 0
        %1443 = vmatpush.bf16.msra.mxu0 %v1434
        %1444 = vmatmul.bf16.gmra.mxu0 %v1431
        %v1445 = vpop.f32.mrf.mxu0
        %v1446 = vadd.f32 0.0, %v1445
        %v1447 = vpop.f32.mrf.mxu0
        %1448 = vdwg.mxu0
        %v1450 = vsel %vm1369, %v1408, 0
        %v1453 = vsel %vm1413, %v1303, 0
        %1455 = vmatpush.bf16.msra.mxu0 0
        %1456 = vmatpush.bf16.msra.mxu0 0
        %1457 = vmatpush.bf16.msra.mxu0 0
        %1458 = vmatpush.bf16.msra.mxu0 0
        %1459 = vmatpush.bf16.msra.mxu0 0
        %1460 = vmatpush.bf16.msra.mxu0 0
        %1461 = vmatpush.bf16.msra.mxu0 0
        %1462 = vmatpush.bf16.msra.mxu0 %v1453
        %1463 = vmatmul.bf16.gmra.mxu0 %v1450
        %v1464 = vpop.f32.mrf.mxu0
        %v1465 = vadd.f32 0.0, %v1464
        %v1466 = vpop.f32.mrf.mxu0
        %1467 = vdwg.mxu0
        %v1469 = vsel %vm1369, %v1409, 0
        %v1472 = vsel %vm1413, %v1304, 0
        %1474 = vmatpush.bf16.msra.mxu0 0
        %1475 = vmatpush.bf16.msra.mxu0 0
        %1476 = vmatpush.bf16.msra.mxu0 0
        %1477 = vmatpush.bf16.msra.mxu0 0
        %1478 = vmatpush.bf16.msra.mxu0 0
        %1479 = vmatpush.bf16.msra.mxu0 0
        %1480 = vmatpush.bf16.msra.mxu0 0
        %1481 = vmatpush.bf16.msra.mxu0 %v1472
        %1482 = vmatmul.bf16.gmra.mxu0 %v1469
        %v1483 = vpop.f32.mrf.mxu0
        %v1484 = vadd.f32 0.0, %v1483
        %v1485 = vpop.f32.mrf.mxu0
        %1486 = vdwg.mxu0
        %v1487 = vrcp.pop %v1396
        %v1488 = vrcp.pop %v1399
        %v1489 = vrcp.pop %v1402
        %v1490 = vrcp.pop %v1405
        %v1491 = vmul.f32 %v1427, %v1487
        %v1492 = vmul.f32 %v1446, %v1488
        %v1493 = vmul.f32 %v1465, %v1489
        %v1494 = vmul.f32 %v1484, %v1490
        %v1495 = vadd.f32 %v1213, %v1491
        %v1496 = vadd.f32 %v1214, %v1492
        %v1497 = vadd.f32 %v1215, %v1493
        %v1498 = vadd.f32 %v1216, %v1494
        %v1499 = vmul.f32 %v1495, 0.33333334
        %v1500 = vmul.f32 %v1496, 0.33333334
        %v1501 = vmul.f32 %v1497, 0.33333334
        %v1502 = vmul.f32 %v1498, 0.33333334
        %1503 = vst.msk [vmem:[#allocation5] sm:$0xff] %vm692, %v1499
        %1504 = vst.msk [vmem:[#allocation5 + $0x8] sm:$0xff] %vm692, %v1500
        %1505 = vst.msk [vmem:[#allocation5 + $0x10] sm:$0xff] %vm692, %v1501
        %1506 = vst.msk [vmem:[#allocation5 + $0x18] sm:$0xff] %vm692, %v1502
        %v1507 = vld [vmem:[#allocation3] sm:$0xf]
        %v1508 = vld [vmem:[#allocation3 + $0x8] sm:$0xf]
        %v1509 = vld [vmem:[#allocation3 + $0x10] sm:$0xf]
        %v1510 = vld [vmem:[#allocation3 + $0x18] sm:$0xf]
        %v1511 = vld [vmem:[#allocation4] sm:$0xf]
        %v1512 = vld [vmem:[#allocation4 + $0x8] sm:$0xf]
        %v1513 = vld [vmem:[#allocation4 + $0x10] sm:$0xf]
        %v1514 = vld [vmem:[#allocation4 + $0x18] sm:$0xf]
        %v1515 = vpack.c.bf16 %v1507, %v1507
        %v1516 = vpack.c.bf16 %v1508, %v1508
        %v1517 = vpack.c.bf16 %v1509, %v1509
        %v1518 = vpack.c.bf16 %v1510, %v1510
        %v1519 = vpack.c.bf16 %v1511, %v1511
        %v1520 = vpack.c.bf16 %v1512, %v1512
        %v1521 = vpack.c.bf16 %v1513, %v1513
        %v1522 = vpack.c.bf16 %v1514, %v1514
        %v1524 = vsel %vm692, %v1515, 0
        %1526 = vmatpush.bf16.xpose.msra.mxu0 0
        %1527 = vmatpush.bf16.xpose.msra.mxu0 0
        %1528 = vmatpush.bf16.xpose.msra.mxu0 0
        %1529 = vmatpush.bf16.xpose.msra.mxu0 0
        %1530 = vmatpush.bf16.xpose.msra.mxu0 0
        %1531 = vmatpush.bf16.xpose.msra.mxu0 0
        %1532 = vmatpush.bf16.xpose.msra.mxu0 0
        %1533 = vmatpush.bf16.xpose.msra.mxu0 %v1524
        %1534 = vmatmul.bf16.gmra.mxu0 %v769
        %v1535 = vpop.f32.mrf.mxu0
        %v1536 = vadd.f32 0.0, %v1535
        %v1537 = vpop.f32.mrf.mxu0
        %1538 = vdwg.mxu0
        %v1540 = vsel %vm692, %v1516, 0
        %1542 = vmatpush.bf16.xpose.msra.mxu0 0
        %1543 = vmatpush.bf16.xpose.msra.mxu0 0
        %1544 = vmatpush.bf16.xpose.msra.mxu0 0
        %1545 = vmatpush.bf16.xpose.msra.mxu0 0
        %1546 = vmatpush.bf16.xpose.msra.mxu0 0
        %1547 = vmatpush.bf16.xpose.msra.mxu0 0
        %1548 = vmatpush.bf16.xpose.msra.mxu0 0
        %1549 = vmatpush.bf16.xpose.msra.mxu0 %v1540
        %1550 = vmatmul.bf16.gmra.mxu0 %v788
        %v1551 = vpop.f32.mrf.mxu0
        %v1552 = vadd.f32 0.0, %v1551
        %v1553 = vpop.f32.mrf.mxu0
        %1554 = vdwg.mxu0
        %v1556 = vsel %vm692, %v1517, 0
        %1558 = vmatpush.bf16.xpose.msra.mxu0 0
        %1559 = vmatpush.bf16.xpose.msra.mxu0 0
        %1560 = vmatpush.bf16.xpose.msra.mxu0 0
        %1561 = vmatpush.bf16.xpose.msra.mxu0 0
        %1562 = vmatpush.bf16.xpose.msra.mxu0 0
        %1563 = vmatpush.bf16.xpose.msra.mxu0 0
        %1564 = vmatpush.bf16.xpose.msra.mxu0 0
        %1565 = vmatpush.bf16.xpose.msra.mxu0 %v1556
        %1566 = vmatmul.bf16.gmra.mxu0 %v807
        %v1567 = vpop.f32.mrf.mxu0
        %v1568 = vadd.f32 0.0, %v1567
        %v1569 = vpop.f32.mrf.mxu0
        %1570 = vdwg.mxu0
        %v1572 = vsel %vm692, %v1518, 0
        %1574 = vmatpush.bf16.xpose.msra.mxu0 0
        %1575 = vmatpush.bf16.xpose.msra.mxu0 0
        %1576 = vmatpush.bf16.xpose.msra.mxu0 0
        %1577 = vmatpush.bf16.xpose.msra.mxu0 0
        %1578 = vmatpush.bf16.xpose.msra.mxu0 0
        %1579 = vmatpush.bf16.xpose.msra.mxu0 0
        %1580 = vmatpush.bf16.xpose.msra.mxu0 0
        %1581 = vmatpush.bf16.xpose.msra.mxu0 %v1572
        %1582 = vmatmul.bf16.gmra.mxu0 %v826
        %v1583 = vpop.f32.mrf.mxu0
        %v1584 = vadd.f32 0.0, %v1583
        %v1585 = vpop.f32.mrf.mxu0
        %1586 = vdwg.mxu0
        %vm1587 = vcmask 27648
        %v1588 = vsel %vm1587, %v1536, -inf
        %1589 = vmax.xlane.f32.xlu0 %v1588
        %v1590 = vpop.xlane.xlu0 %1589
        %v1591 = vsel %vm1587, %v1552, -inf
        %1592 = vmax.xlane.f32.xlu0 %v1591
        %v1593 = vpop.xlane.xlu0 %1592
        %v1594 = vsel %vm1587, %v1568, -inf
        %1595 = vmax.xlane.f32.xlu0 %v1594
        %v1596 = vpop.xlane.xlu0 %1595
        %v1597 = vsel %vm1587, %v1584, -inf
        %1598 = vmax.xlane.f32.xlu0 %v1597
        %v1599 = vpop.xlane.xlu0 %1598
        %v1600 = vsub.f32 %v1536, %v1590
        %v1601 = vsub.f32 %v1552, %v1593
        %v1602 = vsub.f32 %v1568, %v1596
        %v1603 = vsub.f32 %v1584, %v1599
        %v1604 = vmul.f32 %v1600, 1.442695
        %v1605 = vpow.pop %v1604
        %v1606 = vmul.f32 %v1601, 1.442695
        %v1607 = vpow.pop %v1606
        %v1608 = vmul.f32 %v1602, 1.442695
        %v1609 = vpow.pop %v1608
        %v1610 = vmul.f32 %v1603, 1.442695
        %v1611 = vpow.pop %v1610
        %v1612 = vsel %vm1587, %v1605, 0.0
        %1613 = vadd.xlane.f32.xlu0 %v1612
        %v1614 = vpop.xlane.xlu0 %1613
        %v1615 = vsel %vm1587, %v1607, 0.0
        %1616 = vadd.xlane.f32.xlu0 %v1615
        %v1617 = vpop.xlane.xlu0 %1616
        %v1618 = vsel %vm1587, %v1609, 0.0
        %1619 = vadd.xlane.f32.xlu0 %v1618
        %v1620 = vpop.xlane.xlu0 %1619
        %v1621 = vsel %vm1587, %v1611, 0.0
        %1622 = vadd.xlane.f32.xlu0 %v1621
        %v1623 = vpop.xlane.xlu0 %1622
        %v1624 = vpack.c.bf16 %v1605, %v1605
        %v1625 = vpack.c.bf16 %v1607, %v1607
        %v1626 = vpack.c.bf16 %v1609, %v1609
        %v1627 = vpack.c.bf16 %v1611, %v1611
        %v1629 = vsel %vm1087, %v1624, 0
        %v1632 = vsel %vm1131, %v1519, 0
        %1634 = vmatpush.bf16.msra.mxu0 0
        %1635 = vmatpush.bf16.msra.mxu0 0
        %1636 = vmatpush.bf16.msra.mxu0 0
        %1637 = vmatpush.bf16.msra.mxu0 0
        %1638 = vmatpush.bf16.msra.mxu0 0
        %1639 = vmatpush.bf16.msra.mxu0 0
        %1640 = vmatpush.bf16.msra.mxu0 0
        %1641 = vmatpush.bf16.msra.mxu0 %v1632
        %1642 = vmatmul.bf16.gmra.mxu0 %v1629
        %v1643 = vpop.f32.mrf.mxu0
        %v1644 = vadd.f32 0.0, %v1643
        %v1645 = vpop.f32.mrf.mxu0
        %1646 = vdwg.mxu0
        %v1648 = vsel %vm1087, %v1625, 0
        %v1651 = vsel %vm1131, %v1520, 0
        %1653 = vmatpush.bf16.msra.mxu0 0
        %1654 = vmatpush.bf16.msra.mxu0 0
        %1655 = vmatpush.bf16.msra.mxu0 0
        %1656 = vmatpush.bf16.msra.mxu0 0
        %1657 = vmatpush.bf16.msra.mxu0 0
        %1658 = vmatpush.bf16.msra.mxu0 0
        %1659 = vmatpush.bf16.msra.mxu0 0
        %1660 = vmatpush.bf16.msra.mxu0 %v1651
        %1661 = vmatmul.bf16.gmra.mxu0 %v1648
        %v1662 = vpop.f32.mrf.mxu0
        %v1663 = vadd.f32 0.0, %v1662
        %v1664 = vpop.f32.mrf.mxu0
        %1665 = vdwg.mxu0
        %v1667 = vsel %vm1087, %v1626, 0
        %v1670 = vsel %vm1131, %v1521, 0
        %1672 = vmatpush.bf16.msra.mxu0 0
        %1673 = vmatpush.bf16.msra.mxu0 0
        %1674 = vmatpush.bf16.msra.mxu0 0
        %1675 = vmatpush.bf16.msra.mxu0 0
        %1676 = vmatpush.bf16.msra.mxu0 0
        %1677 = vmatpush.bf16.msra.mxu0 0
        %1678 = vmatpush.bf16.msra.mxu0 0
        %1679 = vmatpush.bf16.msra.mxu0 %v1670
        %1680 = vmatmul.bf16.gmra.mxu0 %v1667
        %v1681 = vpop.f32.mrf.mxu0
        %v1682 = vadd.f32 0.0, %v1681
        %v1683 = vpop.f32.mrf.mxu0
        %1684 = vdwg.mxu0
        %v1686 = vsel %vm1087, %v1627, 0
        %v1689 = vsel %vm1131, %v1522, 0
        %1691 = vmatpush.bf16.msra.mxu0 0
        %1692 = vmatpush.bf16.msra.mxu0 0
        %1693 = vmatpush.bf16.msra.mxu0 0
        %1694 = vmatpush.bf16.msra.mxu0 0
        %1695 = vmatpush.bf16.msra.mxu0 0
        %1696 = vmatpush.bf16.msra.mxu0 0
        %1697 = vmatpush.bf16.msra.mxu0 0
        %1698 = vmatpush.bf16.msra.mxu0 %v1689
        %1699 = vmatmul.bf16.gmra.mxu0 %v1686
        %v1700 = vpop.f32.mrf.mxu0
        %v1701 = vadd.f32 0.0, %v1700
        %v1702 = vpop.f32.mrf.mxu0
        %1703 = vdwg.mxu0
        %v1704 = vrcp.pop %v1614
        %v1705 = vrcp.pop %v1617
        %v1706 = vrcp.pop %v1620
        %v1707 = vrcp.pop %v1623
        %v1708 = vmul.f32 %v1644, %v1704
        %v1709 = vmul.f32 %v1663, %v1705
        %v1710 = vmul.f32 %v1682, %v1706
        %v1711 = vmul.f32 %v1701, %v1707
        %v1712 = vld [vmem:[#allocation5] sm:$0xf]
        %v1713 = vld [vmem:[#allocation5 + $0x8] sm:$0xf]
        %v1714 = vld [vmem:[#allocation5 + $0x10] sm:$0xf]
        %v1715 = vld [vmem:[#allocation5 + $0x18] sm:$0xf]
        %v1716 = vadd.f32 %v1712, %v1708
        %v1717 = vadd.f32 %v1713, %v1709
        %v1718 = vadd.f32 %v1714, %v1710
        %v1719 = vadd.f32 %v1715, %v1711
        %vm1720 = vcmask 60416
        %1721 = vst.msk [vmem:[#allocation5] sm:$0xf] %vm1720, %v1716
        %1722 = vst.msk [vmem:[#allocation5 + $0x8] sm:$0xf] %vm1720, %v1717
        %1723 = vst.msk [vmem:[#allocation5 + $0x10] sm:$0xf] %vm1720, %v1718
        %1724 = vst.msk [vmem:[#allocation5 + $0x18] sm:$0xf] %vm1720, %v1719
        %v1725 = vld [vmem:[#allocation3 + $0x4] sm:$0xf]
        %v1726 = vld [vmem:[#allocation3 + $0xc] sm:$0xf]
        %v1727 = vld [vmem:[#allocation3 + $0x14] sm:$0xf]
        %v1728 = vld [vmem:[#allocation3 + $0x1c] sm:$0xf]
        %v1729 = vld [vmem:[#allocation4 + $0x4] sm:$0xf]
        %v1730 = vld [vmem:[#allocation4 + $0xc] sm:$0xf]
        %v1731 = vld [vmem:[#allocation4 + $0x14] sm:$0xf]
        %v1732 = vld [vmem:[#allocation4 + $0x1c] sm:$0xf]
        %v1733 = vpack.c.bf16 %v1725, %v1725
        %v1734 = vpack.c.bf16 %v1726, %v1726
        %v1735 = vpack.c.bf16 %v1727, %v1727
        %v1736 = vpack.c.bf16 %v1728, %v1728
        %v1737 = vpack.c.bf16 %v1729, %v1729
        %v1738 = vpack.c.bf16 %v1730, %v1730
        %v1739 = vpack.c.bf16 %v1731, %v1731
        %v1740 = vpack.c.bf16 %v1732, %v1732
        %v1742 = vunpack.c.l.b16 %v748
        %v1743 = vpack.c.b16 %v1742, %v1742
        %v1744 = vrot.slane %v1743, 2
        %v1746 = vsel %vm692, %v1744, 0
        %v1749 = vsel %vm692, %v1733, 0
        %1751 = vmatpush.bf16.xpose.msra.mxu0 0
        %1752 = vmatpush.bf16.xpose.msra.mxu0 0
        %1753 = vmatpush.bf16.xpose.msra.mxu0 0
        %1754 = vmatpush.bf16.xpose.msra.mxu0 0
        %1755 = vmatpush.bf16.xpose.msra.mxu0 0
        %1756 = vmatpush.bf16.xpose.msra.mxu0 0
        %1757 = vmatpush.bf16.xpose.msra.mxu0 0
        %1758 = vmatpush.bf16.xpose.msra.mxu0 %v1749
        %1759 = vmatmul.bf16.gmra.mxu0 %v1746
        %v1760 = vpop.f32.mrf.mxu0
        %v1761 = vadd.f32 0.0, %v1760
        %v1762 = vpop.f32.mrf.mxu0
        %1763 = vdwg.mxu0
        %v1765 = vunpack.c.l.b16 %v749
        %v1766 = vpack.c.b16 %v1765, %v1765
        %v1767 = vrot.slane %v1766, 2
        %v1769 = vsel %vm692, %v1767, 0
        %v1772 = vsel %vm692, %v1734, 0
        %1774 = vmatpush.bf16.xpose.msra.mxu0 0
        %1775 = vmatpush.bf16.xpose.msra.mxu0 0
        %1776 = vmatpush.bf16.xpose.msra.mxu0 0
        %1777 = vmatpush.bf16.xpose.msra.mxu0 0
        %1778 = vmatpush.bf16.xpose.msra.mxu0 0
        %1779 = vmatpush.bf16.xpose.msra.mxu0 0
        %1780 = vmatpush.bf16.xpose.msra.mxu0 0
        %1781 = vmatpush.bf16.xpose.msra.mxu0 %v1772
        %1782 = vmatmul.bf16.gmra.mxu0 %v1769
        %v1783 = vpop.f32.mrf.mxu0
        %v1784 = vadd.f32 0.0, %v1783
        %v1785 = vpop.f32.mrf.mxu0
        %1786 = vdwg.mxu0
        %v1788 = vunpack.c.l.b16 %v750
        %v1789 = vpack.c.b16 %v1788, %v1788
        %v1790 = vrot.slane %v1789, 2
        %v1792 = vsel %vm692, %v1790, 0
        %v1795 = vsel %vm692, %v1735, 0
        %1797 = vmatpush.bf16.xpose.msra.mxu0 0
        %1798 = vmatpush.bf16.xpose.msra.mxu0 0
        %1799 = vmatpush.bf16.xpose.msra.mxu0 0
        %1800 = vmatpush.bf16.xpose.msra.mxu0 0
        %1801 = vmatpush.bf16.xpose.msra.mxu0 0
        %1802 = vmatpush.bf16.xpose.msra.mxu0 0
        %1803 = vmatpush.bf16.xpose.msra.mxu0 0
        %1804 = vmatpush.bf16.xpose.msra.mxu0 %v1795
        %1805 = vmatmul.bf16.gmra.mxu0 %v1792
        %v1806 = vpop.f32.mrf.mxu0
        %v1807 = vadd.f32 0.0, %v1806
        %v1808 = vpop.f32.mrf.mxu0
        %1809 = vdwg.mxu0
        %v1811 = vunpack.c.l.b16 %v751
        %v1812 = vpack.c.b16 %v1811, %v1811
        %v1813 = vrot.slane %v1812, 2
        %v1815 = vsel %vm692, %v1813, 0
        %v1818 = vsel %vm692, %v1736, 0
        %1820 = vmatpush.bf16.xpose.msra.mxu0 0
        %1821 = vmatpush.bf16.xpose.msra.mxu0 0
        %1822 = vmatpush.bf16.xpose.msra.mxu0 0
        %1823 = vmatpush.bf16.xpose.msra.mxu0 0
        %1824 = vmatpush.bf16.xpose.msra.mxu0 0
        %1825 = vmatpush.bf16.xpose.msra.mxu0 0
        %1826 = vmatpush.bf16.xpose.msra.mxu0 0
        %1827 = vmatpush.bf16.xpose.msra.mxu0 %v1818
        %1828 = vmatmul.bf16.gmra.mxu0 %v1815
        %v1829 = vpop.f32.mrf.mxu0
        %v1830 = vadd.f32 0.0, %v1829
        %v1831 = vpop.f32.mrf.mxu0
        %1832 = vdwg.mxu0
        %v1833 = vsel %vm1587, %v1761, -inf
        %1834 = vmax.xlane.f32.xlu0 %v1833
        %v1835 = vpop.xlane.xlu0 %1834
        %v1836 = vsel %vm1587, %v1784, -inf
        %1837 = vmax.xlane.f32.xlu0 %v1836
        %v1838 = vpop.xlane.xlu0 %1837
        %v1839 = vsel %vm1587, %v1807, -inf
        %1840 = vmax.xlane.f32.xlu0 %v1839
        %v1841 = vpop.xlane.xlu0 %1840
        %v1842 = vsel %vm1587, %v1830, -inf
        %1843 = vmax.xlane.f32.xlu0 %v1842
        %v1844 = vpop.xlane.xlu0 %1843
        %v1845 = vsub.f32 %v1761, %v1835
        %v1846 = vsub.f32 %v1784, %v1838
        %v1847 = vsub.f32 %v1807, %v1841
        %v1848 = vsub.f32 %v1830, %v1844
        %v1849 = vmul.f32 %v1845, 1.442695
        %v1850 = vpow.pop %v1849
        %v1851 = vmul.f32 %v1846, 1.442695
        %v1852 = vpow.pop %v1851
        %v1853 = vmul.f32 %v1847, 1.442695
        %v1854 = vpow.pop %v1853
        %v1855 = vmul.f32 %v1848, 1.442695
        %v1856 = vpow.pop %v1855
        %v1857 = vsel %vm1587, %v1850, 0.0
        %1858 = vadd.xlane.f32.xlu0 %v1857
        %v1859 = vpop.xlane.xlu0 %1858
        %v1860 = vsel %vm1587, %v1852, 0.0
        %1861 = vadd.xlane.f32.xlu0 %v1860
        %v1862 = vpop.xlane.xlu0 %1861
        %v1863 = vsel %vm1587, %v1854, 0.0
        %1864 = vadd.xlane.f32.xlu0 %v1863
        %v1865 = vpop.xlane.xlu0 %1864
        %v1866 = vsel %vm1587, %v1856, 0.0
        %1867 = vadd.xlane.f32.xlu0 %v1866
        %v1868 = vpop.xlane.xlu0 %1867
        %v1869 = vpack.c.bf16 %v1850, %v1850
        %v1870 = vpack.c.bf16 %v1852, %v1852
        %v1871 = vpack.c.bf16 %v1854, %v1854
        %v1872 = vpack.c.bf16 %v1856, %v1856
        %v1874 = vsel %vm1087, %v1869, 0
        %v1877 = vsel %vm1131, %v1737, 0
        %1879 = vmatpush.bf16.msra.mxu0 0
        %1880 = vmatpush.bf16.msra.mxu0 0
        %1881 = vmatpush.bf16.msra.mxu0 0
        %1882 = vmatpush.bf16.msra.mxu0 0
        %1883 = vmatpush.bf16.msra.mxu0 0
        %1884 = vmatpush.bf16.msra.mxu0 0
        %1885 = vmatpush.bf16.msra.mxu0 0
        %1886 = vmatpush.bf16.msra.mxu0 %v1877
        %1887 = vmatmul.bf16.gmra.mxu0 %v1874
        %v1888 = vpop.f32.mrf.mxu0
        %v1889 = vadd.f32 0.0, %v1888
        %v1890 = vpop.f32.mrf.mxu0
        %1891 = vdwg.mxu0
        %v1893 = vsel %vm1087, %v1870, 0
        %v1896 = vsel %vm1131, %v1738, 0
        %1898 = vmatpush.bf16.msra.mxu0 0
        %1899 = vmatpush.bf16.msra.mxu0 0
        %1900 = vmatpush.bf16.msra.mxu0 0
        %1901 = vmatpush.bf16.msra.mxu0 0
        %1902 = vmatpush.bf16.msra.mxu0 0
        %1903 = vmatpush.bf16.msra.mxu0 0
        %1904 = vmatpush.bf16.msra.mxu0 0
        %1905 = vmatpush.bf16.msra.mxu0 %v1896
        %1906 = vmatmul.bf16.gmra.mxu0 %v1893
        %v1907 = vpop.f32.mrf.mxu0
        %v1908 = vadd.f32 0.0, %v1907
        %v1909 = vpop.f32.mrf.mxu0
        %1910 = vdwg.mxu0
        %v1912 = vsel %vm1087, %v1871, 0
        %v1915 = vsel %vm1131, %v1739, 0
        %1917 = vmatpush.bf16.msra.mxu0 0
        %1918 = vmatpush.bf16.msra.mxu0 0
        %1919 = vmatpush.bf16.msra.mxu0 0
        %1920 = vmatpush.bf16.msra.mxu0 0
        %1921 = vmatpush.bf16.msra.mxu0 0
        %1922 = vmatpush.bf16.msra.mxu0 0
        %1923 = vmatpush.bf16.msra.mxu0 0
        %1924 = vmatpush.bf16.msra.mxu0 %v1915
        %1925 = vmatmul.bf16.gmra.mxu0 %v1912
        %v1926 = vpop.f32.mrf.mxu0
        %v1927 = vadd.f32 0.0, %v1926
        %v1928 = vpop.f32.mrf.mxu0
        %1929 = vdwg.mxu0
        %v1931 = vsel %vm1087, %v1872, 0
        %v1934 = vsel %vm1131, %v1740, 0
        %1936 = vmatpush.bf16.msra.mxu0 0
        %1937 = vmatpush.bf16.msra.mxu0 0
        %1938 = vmatpush.bf16.msra.mxu0 0
        %1939 = vmatpush.bf16.msra.mxu0 0
        %1940 = vmatpush.bf16.msra.mxu0 0
        %1941 = vmatpush.bf16.msra.mxu0 0
        %1942 = vmatpush.bf16.msra.mxu0 0
        %1943 = vmatpush.bf16.msra.mxu0 %v1934
        %1944 = vmatmul.bf16.gmra.mxu0 %v1931
        %v1945 = vpop.f32.mrf.mxu0
        %v1946 = vadd.f32 0.0, %v1945
        %v1947 = vpop.f32.mrf.mxu0
        %1948 = vdwg.mxu0
        %v1949 = vrcp.pop %v1859
        %v1950 = vrcp.pop %v1862
        %v1951 = vrcp.pop %v1865
        %v1952 = vrcp.pop %v1868
        %v1953 = vmul.f32 %v1889, %v1949
        %v1954 = vmul.f32 %v1908, %v1950
        %v1955 = vmul.f32 %v1927, %v1951
        %v1956 = vmul.f32 %v1946, %v1952
        %v1957 = vld [vmem:[#allocation5 + $0x4] sm:$0xf]
        %v1958 = vld [vmem:[#allocation5 + $0xc] sm:$0xf]
        %v1959 = vld [vmem:[#allocation5 + $0x14] sm:$0xf]
        %v1960 = vld [vmem:[#allocation5 + $0x1c] sm:$0xf]
        %v1961 = vadd.f32 %v1957, %v1953
        %v1962 = vadd.f32 %v1958, %v1954
        %v1963 = vadd.f32 %v1959, %v1955
        %v1964 = vadd.f32 %v1960, %v1956
        %1965 = vst.msk [vmem:[#allocation5 + $0x4] sm:$0xf] %vm1720, %v1961
        %1966 = vst.msk [vmem:[#allocation5 + $0xc] sm:$0xf] %vm1720, %v1962
        %1967 = vst.msk [vmem:[#allocation5 + $0x14] sm:$0xf] %vm1720, %v1963
        %1968 = vst.msk [vmem:[#allocation5 + $0x1c] sm:$0xf] %vm1720, %v1964
        %v1969 = vld [vmem:[#allocation5] sm:$0xff]
        %v1970 = vld [vmem:[#allocation5 + $0x8] sm:$0xff]
        %v1971 = vld [vmem:[#allocation5 + $0x10] sm:$0xff]
        %v1972 = vld [vmem:[#allocation5 + $0x18] sm:$0xff]
        %1973 = vst.msk [vmem:[#allocation6] sm:$0xff] %vm692, %v1969
        %1975 = vrot.lane.b32.xlu0 %v1970, 8
        %v1976 = vpop.permute.xlu0 %1975
        %vm1978 = vcmask 130112
        %1979 = vst.msk [vmem:[#allocation6] sm:$0xff] %vm1978, %v1976
        %1981 = vrot.lane.b32.xlu0 %v1971, 16
        %v1982 = vpop.permute.xlu0 %1981
        %vm1984 = vcmask 195712
        %1985 = vst.msk [vmem:[#allocation6] sm:$0xff] %vm1984, %v1982
        %1987 = vrot.lane.b32.xlu0 %v1972, 24
        %v1988 = vpop.permute.xlu0 %1987
        %vm1990 = vcmask 261312
        %1991 = vst.msk [vmem:[#allocation6] sm:$0xff] %vm1990, %v1988
        %v1992 = vld [vmem:[#allocation6] sm:$0xff]
        %v1993 = vpack.c.bf16 %v1992, %v1992
        %v1994 = vld [vmem:[%s10] sm:$0x1]
        %v1995 = vmul.f32 %v1994, 2.0
        %v1997 = vperm.slane %v1995, 0
        %v2003 = vunpack.c.l.b16 %v585
        %v2004 = vunpack.c.l.b16 %v586
        %v2005 = vunpack.c.l.b16 %v587
        %v2006 = vunpack.c.l.b16 %v588
        %v2007 = vpack.c.b16 %v2004, %v2003
        %v2008 = vpack.c.b16 %v2006, %v2005
        %v2012 = vsel %vm607, %v1993, 0
        %2014 = vmatpush.bf16.msra.mxu0 0
        %2015 = vmatpush.bf16.msra.mxu0 0
        %2016 = vmatpush.bf16.msra.mxu0 0
        %2017 = vmatpush.bf16.msra.mxu0 0
        %2018 = vmatpush.bf16.msra.mxu0 0
        %2019 = vmatpush.bf16.msra.mxu0 0
        %2020 = vmatpush.bf16.msra.mxu0 %v2008
        %2021 = vmatpush.bf16.msra.mxu0 %v2007
        %2022 = vmatmul.bf16.gmra.mxu0 %v2012
        %v2023 = vpop.f32.mrf.mxu0
        %v2024 = vadd.f32 %v1997, %v2023
        %v2025 = vpop.f32.mrf.mxu0
        %2026 = vdwg.mxu0
        %v2027 = vld [vmem:[%s11] sm:$0xff]
        %v2028 = vxor.u32 %v2027, 2147483648
        %v2029 = vmul.f32 %v2028, 1.442695
        %v2030 = vpow.pop %v2029
        %v2031 = vadd.f32 %v2030, 1.0
        %v2032 = vrcp.pop %v2031
        %v2033 = vmul.f32 %v2031, %v2032
        %v2034 = vsub.f32 1.0, %v2033
        %v2035 = vmul.f32 %v2032, %v2034
        %v2036 = vadd.f32 %v2032, %v2035
        %vm2037 = vweird.f32 %v2031
        %vm2038 = vweird.f32 %v2032
        %vm2039 = vmor %vm2037, %vm2038
        %v2040 = vsel %vm2039, %v2032, %v2036
        %v2041 = vand.u32 2147483647, %v2031
        %vm2042 = vcmp.eq.f32.partialorder %v2041, 8.507059e+37
        %v2043 = vand.u32 %v2031, 2147483648
        %v2044 = vor.u32 1.1754944e-38, %v2043
        %v2045 = vsel %vm2042, %v2044, %v2040
        %v2046 = vmul.f32 1.0, %v2045
        %2048 = vset.pattern.permute.xlu0 0
        %2049 = vperm.xlu0 %2048, %v2046
        %v2050 = vpop.permute.xlu0 %2049
        %v2052 = vmul.f32 %v2024, %v2050
        %2053 = vst.msk [vmem:[%s571] sm:$0xff] %vm607, %v2052
        %s2054 = sand.u32 %s309, 1
        %s2055 = scalar_lea.sflag [#allocation9], %s2054
        %s2056 = sand.u32 %s309, 1
        %s2057 = smul.addr %s2056, 8
        %s2058 = scalar_lea.vmem [#allocation19], %s2057
        // Predicated region
        $region97: #{tpu_custom_call.1} parent=67 // pred_check
          %p2059 = pneg %p319
        $region98: #{tpu_custom_call.1} parent=67 // pred_check_branch
          %2061 = sbr.rel (%p2059) target = $region100
        $region99: #{tpu_custom_call.1} parent=67 // pred_region
          %2063 = vsyncadd %s2055, 0
          %s2064 = smul.addr %s34, 8
          %s2065 = scalar_lea.hbm %s12, %s2064
          %s2067 = sshll.u32 %s2058, 4
          %s2068 = int_to_ptr.vmem [resolvable:$true] %s2067
          %s2069 = sshll.u32 %s2065, 4
          %s2070 = int_to_ptr.hbm [resolvable:$true] %s2069
          %2072 = dma.vmem_to_hbm [thread:$0]  %s2068, 128, %s2070, %s2055
        $region100: #{tpu_custom_call.1} parent=67 // pred_fallthru
          _
      $region68: #{tpu_custom_call.1} parent=5 // pred_fallthru
        _
      %p2073 = scmp.le.s32.totalorder 2, %s29
      // Predicated region
      $region101: #{tpu_custom_call.1} parent=5 // pred_check
        %p2074 = pneg %p2073
      $region102: #{tpu_custom_call.1} parent=5 // pred_check_branch
        %2076 = sbr.rel (%p2074) target = $region104
      $region103: #{tpu_custom_call.1} parent=5 // pred_region
        %s2077 = ssub.s32 %s29, 2
        // Predicated region
        $region105: #{tpu_custom_call.1} parent=103 // pred_check
          %p2078 = pneg %p325
        $region106: #{tpu_custom_call.1} parent=103 // pred_check_branch
          %2080 = sbr.rel (%p2078) target = $region108
        $region107: #{tpu_custom_call.1} parent=103 // pred_region
          %s2081 = sand.u32 %s310, 1
          %s2082 = scalar_lea.sflag [#allocation9], %s2081
          %s2083 = sand.u32 %s310, 1
          %s2084 = smul.addr %s2083, 8
          %s2085 = scalar_lea.vmem [#allocation19], %s2084
          %2087 = dma.done %s2082, 128
        $region108: #{tpu_custom_call.1} parent=103 // pred_fallthru
          _
      $region104: #{tpu_custom_call.1} parent=5 // pred_fallthru
        _
    $region6: #{tpu_custom_call.1} parent=1 // loop_footer
      %s33 = sadd.s32 1, %s29
    $region7: #{tpu_custom_call.1} parent=1 // loop_footer_branch
      %28 = sbr.rel target = $region3
    $region8: #{tpu_custom_call.1} parent=1 // loop_exit
      _
    %2088 = vsyncpa [#allocation8], 1
    %s2089 = scalar_lea.sflag [#allocation8], 1
    %2090 = vsyncpa %s2089, 1
    %2091 = vsyncpa [#allocation11], 1
    %s2092 = scalar_lea.sflag [#allocation11], 1
    %2093 = vsyncpa %s2092, 1
    %2094 = vsyncpa [#allocation14], 1
    %2095 = vsyncpa [#allocation17], 1
    %2096 = vsyncpa [#allocation9], 1
    %s2097 = scalar_lea.sflag [#allocation9], 1
    %2098 = vsyncpa %s2097, 1

</llo_original>
